<compile_context>
chip_gen: v5e
topology: v5e:2x2
jax: 0.10.0
libtpu: 0.0.40
codegen_flags: <defaults>
</compile_context>

<pallas_src>
import functools
import math

import jax
import jax.numpy as jnp
from jax.experimental import pallas as pl
from jax.experimental.pallas import tpu as pltpu

EPS = 1e-5


# --------------------------------------------------------------------------- #
# kernels
# --------------------------------------------------------------------------- #
def conv1_stats_kernel(x_ref, w1t_ref, stats1_ref):
    """Per-row-tile partial bn1 sums of h1 = x @ W1^T (h1 itself not stored)."""
    h = jnp.dot(x_ref[...], w1t_ref[...], preferred_element_type=jnp.float32)
    s = jnp.sum(h, axis=0, keepdims=True)
    ss = jnp.sum(h * h, axis=0, keepdims=True)
    stats1_ref[...] = jnp.concatenate([s, ss], axis=0)


def bn1_conv2_stats_kernel(x_ref, stats1_ref, bn_ref, w1t_ref, w2t_ref,
                           h2_ref, stats2_ref, pool_ref, sc1_ref, *, inv_n):
    """conv1 (recomputed) -> bn1 -> relu -> conv2; per-batch partial bn2 sums
    and SE pooling sums.  bn1 scale/shift computed once per batch row."""
    l = pl.program_id(1)

    @pl.when(l == 0)
    def _prologue():
        s = jnp.sum(stats1_ref[...], axis=0)                  # reduce row-tile partials
        mu1 = s[0:1, :] * inv_n
        var1 = s[1:2, :] * inv_n - mu1 * mu1
        scale1 = jax.lax.rsqrt(var1 + EPS) * bn_ref[0:1, :]   # gamma1 folded in
        shift1 = bn_ref[1:2, :] - mu1 * scale1                # beta1 folded in
        sc1_ref[...] = jnp.concatenate([scale1, shift1], axis=0)
        stats2_ref[...] = jnp.zeros_like(stats2_ref)
        pool_ref[...] = jnp.zeros_like(pool_ref)

    h1 = jnp.dot(x_ref[...], w1t_ref[...], preferred_element_type=jnp.float32)
    a1 = jnp.maximum(h1 * sc1_ref[0:1, :] + sc1_ref[1:2, :], 0.0)
    h2 = jnp.dot(a1, w2t_ref[...], preferred_element_type=jnp.float32)
    h2_ref[...] = h2

    s2 = jnp.sum(h2, axis=0, keepdims=True)
    ss2 = jnp.sum(h2 * h2, axis=0, keepdims=True)
    stats2_ref[...] += jnp.concatenate([s2, ss2], axis=0)     # single (2, Cp) RMW
    pool_ref[...] += s2


def finalize_kernel(h2_ref, x_ref, stats2_ref, pool_ref, bn_ref,
                    wse1t_ref, wse2t_ref, o_ref, sc2_ref, gate_ref,
                    *, inv_n, inv_l):
    """out = relu(bn2(h2) * se_gate[b] + x).  bn2 scale/shift and the SE gate
    for this batch row are computed once in the l == 0 prologue (fused former
    pass 3)."""
    l = pl.program_id(1)

    @pl.when(l == 0)
    def _prologue():
        s = jnp.sum(stats2_ref[...], axis=0)                  # reduce per-batch partials
        mu2 = s[0:1, :] * inv_n
        var2 = s[1:2, :] * inv_n - mu2 * mu2
        scale2 = jax.lax.rsqrt(var2 + EPS) * bn_ref[2:3, :]
        shift2 = bn_ref[3:4, :] - mu2 * scale2
        sc2_ref[...] = jnp.concatenate([scale2, shift2], axis=0)
        # bn2 is per-channel affine, so mean_L(bn2(h2)) == bn2(mean_L(h2)).
        y = pool_ref[...] * inv_l
        y = y * scale2 + shift2
        z = jnp.maximum(
            jnp.dot(y, wse1t_ref[...], preferred_element_type=jnp.float32), 0.0)
        gate_ref[...] = jax.nn.sigmoid(
            jnp.dot(z, wse2t_ref[...], preferred_element_type=jnp.float32))

    out = (h2_ref[...] * sc2_ref[0:1, :] + sc2_ref[1:2, :]) * gate_ref[...] \
        + x_ref[...]
    o_ref[...] = jnp.maximum(out, 0.0)


# --------------------------------------------------------------------------- #
# wrapper
# --------------------------------------------------------------------------- #
def _round_up(x, m):
    return ((x + m - 1) // m) * m


def _pick_tile(n, max_tile, quantum=8):
    """Largest multiple of `quantum` that divides n and is <= max_tile (else n)."""
    if n <= max_tile:
        return n
    if n % quantum != 0:
        return n  # TODO(synk): ragged last tile not supported; caller should pad.
    t = (max_tile // quantum) * quantum
    while t > quantum and n % t != 0:
        t -= quantum
    return t if n % t == 0 else n


def _compiler_params(dims, streamed, resident):
    """Streamed blocks counted x2 (double buffer), residents once; 40 MiB cap
    keeps the budget safe on v7x (64 MiB VMEM) as well as v5e/v6e (128 MiB)."""
    stream_b = 2 * sum(math.prod(s) for s in streamed) * 4
    res_b = sum(math.prod(s) for s in resident) * 4
    vmem = stream_b + res_b + (2 << 20)          # scratch + headroom
    vmem = int(min(max(vmem, 8 << 20), 40 << 20))
    return pltpu.CompilerParams(dimension_semantics=dims, vmem_limit_bytes=vmem)


def se_basic_block(x_blc, params, *, max_row_tile=512, max_len_tile=512):
    """x_blc: (B, L, C) channels-last f32. Returns (B, L, C)."""
    B, L, C = x_blc.shape
    f32 = jnp.float32
    Cp = _round_up(max(C, 128), 128)             # lane-dense channel dim
    H = params["wse1"].shape[0]
    Hp = _round_up(max(H, 128), 128)
    N = B * L

    def pad_to(a, shape):
        return jnp.zeros(shape, f32).at[
            tuple(slice(0, s) for s in a.shape)].set(a.astype(f32))

    # pre-transposed, lane-padded weights (one-time cost; no in-kernel .T)
    w1t = pad_to(params["w1"].T, (Cp, Cp))
    w2t = pad_to(params["w2"].T, (Cp, Cp))
    wse1t = pad_to(params["wse1"].T, (Cp, Hp))
    wse2t = pad_to(params["wse2"].T, (Hp, Cp))
    # BN affine params packed into one resident (4, Cp) tile: g1, be1, g2, be2
    bn = pad_to(jnp.concatenate([params["g1"], params["be1"],
                                 params["g2"], params["be2"]], axis=0), (4, Cp))
    # conv biases b1/b2 are intentionally dropped: the training-mode BatchNorm
    # right after each conv subtracts the per-channel mean, cancelling them.

    xp = pad_to(x_blc, (B, L, Cp))
    x_flat = xp.reshape(N, Cp)

    TR = _pick_tile(N, max_row_tile)             # rows per tile, pass 1
    TL = _pick_tile(L, max_len_tile)             # length tile, passes 2/3
    nR = N // TR
    nL = L // TL
    inv_n = 1.0 / N
    inv_l = 1.0 / L

    # ---- pass 1: conv1 + per-row-tile partial bn1 sums (fully parallel) -----
    stats1 = pl.pallas_call(
        conv1_stats_kernel,
        grid=(nR,),
        in_specs=[
            pl.BlockSpec((TR, Cp), lambda r: (r, 0)),
            pl.BlockSpec((Cp, Cp), lambda r: (0, 0)),
        ],
        out_specs=pl.BlockSpec((pl.Squeezed(), 2, Cp), lambda r: (r, 0, 0)),
        out_shape=jax.ShapeDtypeStruct((nR, 2, Cp), f32),
        compiler_params=_compiler_params(
            ("parallel",), [(TR, Cp)], [(Cp, Cp), (2, Cp)]),
    )(x_flat, w1t)

    # ---- pass 2: conv1(recompute)+bn1+relu+conv2 + partial bn2 / SE pools ---
    h2, stats2, pool = pl.pallas_call(
        functools.partial(bn1_conv2_stats_kernel, inv_n=inv_n),
        grid=(B, nL),
        in_specs=[
            pl.BlockSpec((pl.Squeezed(), TL, Cp), lambda b, l: (b, l, 0)),   # x
            pl.BlockSpec((nR, 2, Cp), lambda b, l: (0, 0, 0)),               # stats1 partials
            pl.BlockSpec((4, Cp), lambda b, l: (0, 0)),                      # bn params
            pl.BlockSpec((Cp, Cp), lambda b, l: (0, 0)),                     # w1t
            pl.BlockSpec((Cp, Cp), lambda b, l: (0, 0)),                     # w2t
        ],
        out_specs=[
            pl.BlockSpec((pl.Squeezed(), TL, Cp), lambda b, l: (b, l, 0)),   # h2
            pl.BlockSpec((pl.Squeezed(), 2, Cp), lambda b, l: (b, 0, 0)),    # bn2 partials
            pl.BlockSpec((pl.Squeezed(), 1, Cp), lambda b, l: (b, 0, 0)),    # SE pool row
        ],
        out_shape=[
            jax.ShapeDtypeStruct((B, L, Cp), f32),
            jax.ShapeDtypeStruct((B, 2, Cp), f32),
            jax.ShapeDtypeStruct((B, 1, Cp), f32),
        ],
        scratch_shapes=[pltpu.VMEM((2, Cp), f32)],                           # scale1/shift1
        compiler_params=_compiler_params(
            ("parallel", "arbitrary"),
            [(TL, Cp), (TL, Cp)],
            [(nR, 2, Cp), (4, Cp), (Cp, Cp), (Cp, Cp), (2, Cp), (1, Cp)]),
    )(xp, stats1, bn, w1t, w2t)

    # ---- pass 3: bn2 + fused SE gate (prologue) + residual + relu -----------
    out_p = pl.pallas_call(
        functools.partial(finalize_kernel, inv_n=inv_n, inv_l=inv_l),
        grid=(B, nL),
        in_specs=[
            pl.BlockSpec((pl.Squeezed(), TL, Cp), lambda b, l: (b, l, 0)),   # h2
            pl.BlockSpec((pl.Squeezed(), TL, Cp), lambda b, l: (b, l, 0)),   # x (residual)
            pl.BlockSpec((B, 2, Cp), lambda b, l: (0, 0, 0)),                # bn2 partials
            pl.BlockSpec((pl.Squeezed(), 1, Cp), lambda b, l: (b, 0, 0)),    # SE pool row
            pl.BlockSpec((4, Cp), lambda b, l: (0, 0)),                      # bn params
            pl.BlockSpec((Cp, Hp), lambda b, l: (0, 0)),                     # wse1t
            pl.BlockSpec((Hp, Cp), lambda b, l: (0, 0)),                     # wse2t
        ],
        out_specs=pl.BlockSpec((pl.Squeezed(), TL, Cp), lambda b, l: (b, l, 0)),
        out_shape=jax.ShapeDtypeStruct((B, L, Cp), f32),
        scratch_shapes=[pltpu.VMEM((2, Cp), f32),                            # scale2/shift2
                        pltpu.VMEM((1, Cp), f32)],                           # gate row
        compiler_params=_compiler_params(
            ("parallel", "arbitrary"),
            [(TL, Cp), (TL, Cp), (TL, Cp)],
            [(B, 2, Cp), (1, Cp), (4, Cp), (Cp, Hp), (Hp, Cp)]),
    )(h2, xp, stats2, pool, bn, wse1t, wse2t)

    return out_p[:, :, :C]


# --------------------------------------------------------------------------- #
# pure-JAX reference (includes the conv biases -> also validates their exact
# cancellation by the training-mode BatchNorm)
# --------------------------------------------------------------------------- #
def reference(x_blc, p):
    B, L, C = x_blc.shape
    x2 = x_blc.reshape(B * L, C)
    h = x2 @ p["w1"].T + p["b1"]
    mu, var = jnp.mean(h, 0, keepdims=True), jnp.var(h, 0, keepdims=True)
    h = (h - mu) / jnp.sqrt(var + EPS) * p["g1"] + p["be1"]
    h = jnp.maximum(h, 0.0)
    h = h @ p["w2"].T + p["b2"]
    mu, var = jnp.mean(h, 0, keepdims=True), jnp.var(h, 0, keepdims=True)
    h = (h - mu) / jnp.sqrt(var + EPS) * p["g2"] + p["be2"]
    h3 = h.reshape(B, L, C)
    y = jnp.mean(h3, axis=1)
    y = jnp.maximum(y @ p["wse1"].T, 0.0)
    y = jax.nn.sigmoid(y @ p["wse2"].T)
    out = h3 * y[:, None, :] + x_blc
    return jnp.maximum(out, 0.0)


if __name__ == "__main__":
    B, C, L = 4, 16, 256        # inplanes == planes (residual requires it)
    RED = 4

    key = jax.random.PRNGKey(0)
    ks = jax.random.split(key, 12)

    x_ncl = jax.random.normal(ks[0], (B, C, L), jnp.float32)   # PyTorch NCL input

    params = {
        # conv1 / conv2: Conv1d weight (out, in, k=1) collapsed to (out, in)
        "w1": 0.1 * jax.random.normal(ks[1], (C, C), jnp.float32),
        "b1": 0.1 * jax.random.normal(ks[2], (1, C), jnp.float32),
        "w2": 0.1 * jax.random.normal(ks[3], (C, C), jnp.float32),
        "b2": 0.1 * jax.random.normal(ks[4], (1, C), jnp.float32),
        # BatchNorm1d affine params (non-trivial to exercise the full path)
        "g1": 1.0 + 0.1 * jax.random.normal(ks[5], (1, C), jnp.float32),
        "be1": 0.1 * jax.random.normal(ks[6], (1, C), jnp.float32),
        "g2": 1.0 + 0.1 * jax.random.normal(ks[7], (1, C), jnp.float32),
        "be2": 0.1 * jax.random.normal(ks[8], (1, C), jnp.float32),
        # SE fc weights (bias=False): (C//4, C) and (C, C//4)
        "wse1": 0.1 * jax.random.normal(ks[9], (C // RED, C), jnp.float32),
        "wse2": 0.1 * jax.random.normal(ks[10], (C, C // RED), jnp.float32),
    }

    # to kernel layout (B, L, C)
    x_blc = jnp.transpose(x_ncl, (0, 2, 1))

    out_blc = jax.jit(se_basic_block)(x_blc, params)
    out_blc = jax.block_until_ready(out_blc)

    ref_blc = reference(x_blc, params)
    assert out_blc.shape == (B, L, C)
    max_err = float(jnp.max(jnp.abs(out_blc - ref_blc)))
    assert jnp.allclose(out_blc, ref_blc, atol=1e-4, rtol=1e-4), \
        f"mismatch vs reference (max abs err {max_err})"

    # back to PyTorch NCL layout for the module's output convention
    out_ncl = jnp.transpose(out_blc, (0, 2, 1))
    assert out_ncl.shape == (B, C, L)

    print("KERNEL_OK")
</pallas_src>

<mosaic_0001>
module attributes {stable_mosaic.version = 11 : i64} {
  func.func @conv1_stats_kernel(%arg0: i32, %arg1: memref<512x128xf32, #tpu.memory_space<vmem>>, %arg2: memref<128x128xf32, #tpu.memory_space<vmem>>, %arg3: memref<1x2x128xf32, #tpu.memory_space<vmem>>) attributes {dimension_semantics = [#tpu.dimension_semantics<parallel>], iteration_bounds = array<i64: 2>, scalar_prefetch = 0 : i64, scratch_operands = 0 : i64, tpu.core_type = #tpu.core_type<tc>, window_params = [{transform_indices = @transform_0, window_bounds = array<i64: 512, 128>}, {pipeline_mode = #tpu.pipeline_mode<synchronous>, transform_indices = @transform_1, window_bounds = array<i64: 128, 128>}, {transform_indices = @transform_2, window_bounds = array<i64: 1, 2, 128>}]} {
    %c0 = arith.constant 0 : index
    %c0_0 = arith.constant 0 : index
    %0 = vector.load %arg1[%c0, %c0_0] : memref<512x128xf32, #tpu.memory_space<vmem>>, vector<512x128xf32>
    %c0_1 = arith.constant 0 : index
    %c0_2 = arith.constant 0 : index
    %1 = vector.load %arg2[%c0_1, %c0_2] : memref<128x128xf32, #tpu.memory_space<vmem>>, vector<128x128xf32>
    %cst = arith.constant dense<0.000000e+00> : vector<512x128xf32>
    %2 = tpu.matmul %0, %1, %cst {dimension_numbers = #tpu.dot_dimension_numbers<[1], [0], [0], [1], [0, 0, 1, 1], [], []>} : vector<512x128xf32>, vector<128x128xf32>, vector<512x128xf32> -> vector<512x128xf32>
    %cst_3 = arith.constant dense<0.000000e+00> : vector<128xf32>
    %3 = vector.multi_reduction <add>, %2, %cst_3 [0] : vector<512x128xf32> to vector<128xf32>
    %4 = vector.shape_cast %3 : vector<128xf32> to vector<1x128xf32>
    %5 = arith.mulf %2, %2 : vector<512x128xf32>
    %cst_4 = arith.constant dense<0.000000e+00> : vector<128xf32>
    %6 = vector.multi_reduction <add>, %5, %cst_4 [0] : vector<512x128xf32> to vector<128xf32>
    %7 = vector.shape_cast %6 : vector<128xf32> to vector<1x128xf32>
    %8 = tpu.concatenate %4, %7 in 0 : vector<1x128xf32>, vector<1x128xf32> -> vector<2x128xf32>
    %c0_5 = arith.constant 0 : index
    %c0_6 = arith.constant 0 : index
    %c0_7 = arith.constant 0 : index
    %9 = vector.load %arg3[%c0_5, %c0_6, %c0_7] : memref<1x2x128xf32, #tpu.memory_space<vmem>>, vector<1x2x128xf32>
    %10 = vector.shape_cast %9 : vector<1x2x128xf32> to vector<2x128xf32>
    %11 = vector.shape_cast %8 : vector<2x128xf32> to vector<1x2x128xf32>
    tpu.vector_store %arg3[%c0_5, %c0_6, %c0_7], %11 {strides = array<i32>} : memref<1x2x128xf32, #tpu.memory_space<vmem>>, vector<1x2x128xf32>,
    return
  }
  func.func @transform_0(%arg0: i32) -> (i32, i32) {
    %c0_i32 = arith.constant 0 : i32
    %c0_i32_0 = arith.constant 0 : i32
    return %arg0, %c0_i32 : i32, i32
  }
  func.func @transform_1(%arg0: i32) -> (i32, i32) {
    %c0_i32 = arith.constant 0 : i32
    %c0_i32_0 = arith.constant 0 : i32
    %c0_i32_1 = arith.constant 0 : i32
    return %c0_i32, %c0_i32_0 : i32, i32
  }
  func.func @transform_2(%arg0: i32) -> (i32, i32, i32) {
    %c0_i32 = arith.constant 0 : i32
    %c0_i32_0 = arith.constant 0 : i32
    %c0_i32_1 = arith.constant 0 : i32
    return %arg0, %c0_i32, %c0_i32_0 : i32, i32, i32
  }
}

module attributes {stable_mosaic.version = 11 : i64} {
  func.func @bn1_conv2_stats_kernel(%arg0: i32, %arg1: i32, %arg2: memref<1x256x128xf32, #tpu.memory_space<vmem>>, %arg3: memref<2x2x128xf32, #tpu.memory_space<vmem>>, %arg4: memref<4x128xf32, #tpu.memory_space<vmem>>, %arg5: memref<128x128xf32, #tpu.memory_space<vmem>>, %arg6: memref<128x128xf32, #tpu.memory_space<vmem>>, %arg7: memref<1x256x128xf32, #tpu.memory_space<vmem>>, %arg8: memref<1x2x128xf32, #tpu.memory_space<vmem>>, %arg9: memref<1x1x128xf32, #tpu.memory_space<vmem>>, %arg10: memref<2x128xf32, #tpu.memory_space<vmem>>) attributes {dimension_semantics = [#tpu.dimension_semantics<parallel>, #tpu.dimension_semantics<arbitrary>], iteration_bounds = array<i64: 4, 1>, scalar_prefetch = 0 : i64, scratch_operands = 1 : i64, tpu.core_type = #tpu.core_type<tc>, window_params = [{transform_indices = @transform_0, window_bounds = array<i64: 1, 256, 128>}, {pipeline_mode = #tpu.pipeline_mode<synchronous>, transform_indices = @transform_1, window_bounds = array<i64: 2, 2, 128>}, {pipeline_mode = #tpu.pipeline_mode<synchronous>, transform_indices = @transform_2, window_bounds = array<i64: 4, 128>}, {pipeline_mode = #tpu.pipeline_mode<synchronous>, transform_indices = @transform_3, window_bounds = array<i64: 128, 128>}, {pipeline_mode = #tpu.pipeline_mode<synchronous>, transform_indices = @transform_4, window_bounds = array<i64: 128, 128>}, {transform_indices = @transform_5, window_bounds = array<i64: 1, 256, 128>}, {transform_indices = @transform_6, window_bounds = array<i64: 1, 2, 128>}, {transform_indices = @transform_7, window_bounds = array<i64: 1, 1, 128>}]} {
    %c0_i32 = arith.constant 0 : i32
    %0 = arith.cmpi eq, %arg1, %c0_i32 : i32
    %1 = arith.extui %0 : i1 to i32
    %c0_i32_0 = arith.constant 0 : i32
    %2 = arith.cmpi ne, %1, %c0_i32_0 : i32
    scf.if %2 {
      %c0_29 = arith.constant 0 : index
      %c0_30 = arith.constant 0 : index
      %c0_31 = arith.constant 0 : index
      %38 = vector.load %arg3[%c0_29, %c0_30, %c0_31] : memref<2x2x128xf32, #tpu.memory_space<vmem>>, vector<2x2x128xf32>
      %cst_32 = arith.constant dense<0.000000e+00> : vector<2x128xf32>
      %39 = vector.multi_reduction <add>, %38, %cst_32 [0] : vector<2x2x128xf32> to vector<2x128xf32>
      %40 = vector.extract_strided_slice %39 {offsets = [0, 0], sizes = [1, 128], strides = [1, 1]} : vector<2x128xf32> to vector<1x128xf32>
      %cst_33 = arith.constant 9.765625E-4 : f32
      %41 = vector.broadcast %cst_33 : f32 to vector<1x128xf32>
      %42 = arith.mulf %40, %41 : vector<1x128xf32>
      %43 = vector.extract_strided_slice %39 {offsets = [1, 0], sizes = [1, 128], strides = [1, 1]} : vector<2x128xf32> to vector<1x128xf32>
      %cst_34 = arith.constant 9.765625E-4 : f32
      %44 = vector.broadcast %cst_34 : f32 to vector<1x128xf32>
      %45 = arith.mulf %43, %44 : vector<1x128xf32>
      %46 = arith.mulf %42, %42 : vector<1x128xf32>
      %47 = arith.subf %45, %46 : vector<1x128xf32>
      %cst_35 = arith.constant 9.99999974E-6 : f32
      %48 = vector.broadcast %cst_35 : f32 to vector<1x128xf32>
      %49 = arith.addf %47, %48 : vector<1x128xf32>
      %50 = math.rsqrt %49 : vector<1x128xf32>
      %c0_36 = arith.constant 0 : index
      %c0_37 = arith.constant 0 : index
      %51 = vector.load %arg4[%c0_36, %c0_37] : memref<4x128xf32, #tpu.memory_space<vmem>>, vector<1x128xf32>
      %52 = arith.mulf %50, %51 : vector<1x128xf32>
      %c1_38 = arith.constant 1 : index
      %c0_39 = arith.constant 0 : index
      %53 = vector.load %arg4[%c1_38, %c0_39] : memref<4x128xf32, #tpu.memory_space<vmem>>, vector<1x128xf32>
      %54 = arith.mulf %42, %52 : vector<1x128xf32>
      %55 = arith.subf %53, %54 : vector<1x128xf32>
      %56 = tpu.concatenate %52, %55 in 0 : vector<1x128xf32>, vector<1x128xf32> -> vector<2x128xf32>
      %c0_40 = arith.constant 0 : index
      %c0_41 = arith.constant 0 : index
      %57 = vector.load %arg10[%c0_40, %c0_41] : memref<2x128xf32, #tpu.memory_space<vmem>>, vector<2x128xf32>
      tpu.vector_store %arg10[%c0_40, %c0_41], %56 {strides = array<i32>} : memref<2x128xf32, #tpu.memory_space<vmem>>, vector<2x128xf32>,
      %cst_42 = arith.constant 0.000000e+00 : f32
      %58 = vector.broadcast %cst_42 : f32 to vector<2x128xf32>
      %c0_43 = arith.constant 0 : index
      %c0_44 = arith.constant 0 : index
      %c0_45 = arith.constant 0 : index
      %59 = vector.load %arg8[%c0_43, %c0_44, %c0_45] : memref<1x2x128xf32, #tpu.memory_space<vmem>>, vector<1x2x128xf32>
      %60 = vector.shape_cast %59 : vector<1x2x128xf32> to vector<2x128xf32>
      %61 = vector.shape_cast %58 : vector<2x128xf32> to vector<1x2x128xf32>
      tpu.vector_store %arg8[%c0_43, %c0_44, %c0_45], %61 {strides = array<i32>} : memref<1x2x128xf32, #tpu.memory_space<vmem>>, vector<1x2x128xf32>,
      %cst_46 = arith.constant 0.000000e+00 : f32
      %62 = vector.broadcast %cst_46 : f32 to vector<1x128xf32>
      %c0_47 = arith.constant 0 : index
      %c0_48 = arith.constant 0 : index
      %c0_49 = arith.constant 0 : index
      %63 = vector.load %arg9[%c0_47, %c0_48, %c0_49] : memref<1x1x128xf32, #tpu.memory_space<vmem>>, vector<1x1x128xf32>
      %64 = vector.shape_cast %63 : vector<1x1x128xf32> to vector<1x128xf32>
      %65 = vector.shape_cast %62 : vector<1x128xf32> to vector<1x1x128xf32>
      tpu.vector_store %arg9[%c0_47, %c0_48, %c0_49], %65 {strides = array<i32>} : memref<1x1x128xf32, #tpu.memory_space<vmem>>, vector<1x1x128xf32>,
    } else {
    }
    %c0 = arith.constant 0 : index
    %c0_1 = arith.constant 0 : index
    %c0_2 = arith.constant 0 : index
    %3 = vector.load %arg2[%c0, %c0_1, %c0_2] : memref<1x256x128xf32, #tpu.memory_space<vmem>>, vector<1x256x128xf32>
    %4 = vector.shape_cast %3 : vector<1x256x128xf32> to vector<256x128xf32>
    %c0_3 = arith.constant 0 : index
    %c0_4 = arith.constant 0 : index
    %5 = vector.load %arg5[%c0_3, %c0_4] : memref<128x128xf32, #tpu.memory_space<vmem>>, vector<128x128xf32>
    %cst = arith.constant dense<0.000000e+00> : vector<256x128xf32>
    %6 = tpu.matmul %4, %5, %cst {dimension_numbers = #tpu.dot_dimension_numbers<[1], [0], [0], [1], [0, 0, 1, 1], [], []>} : vector<256x128xf32>, vector<128x128xf32>, vector<256x128xf32> -> vector<256x128xf32>
    %c0_5 = arith.constant 0 : index
    %c0_6 = arith.constant 0 : index
    %7 = vector.load %arg10[%c0_5, %c0_6] : memref<2x128xf32, #tpu.memory_space<vmem>>, vector<1x128xf32>
    %8 = vector.broadcast %7 : vector<1x128xf32> to vector<256x128xf32>
    %9 = arith.mulf %6, %8 : vector<256x128xf32>
    %c1 = arith.constant 1 : index
    %c0_7 = arith.constant 0 : index
    %10 = vector.load %arg10[%c1, %c0_7] : memref<2x128xf32, #tpu.memory_space<vmem>>, vector<1x128xf32>
    %11 = vector.broadcast %10 : vector<1x128xf32> to vector<256x128xf32>
    %12 = arith.addf %9, %11 : vector<256x128xf32>
    %cst_8 = arith.constant 0.000000e+00 : f32
    %13 = vector.broadcast %cst_8 : f32 to vector<256x128xf32>
    %14 = arith.maximumf %12, %13 : vector<256x128xf32>
    %c0_9 = arith.constant 0 : index
    %c0_10 = arith.constant 0 : index
    %15 = vector.load %arg6[%c0_9, %c0_10] : memref<128x128xf32, #tpu.memory_space<vmem>>, vector<128x128xf32>
    %cst_11 = arith.constant dense<0.000000e+00> : vector<256x128xf32>
    %16 = tpu.matmul %14, %15, %cst_11 {dimension_numbers = #tpu.dot_dimension_numbers<[1], [0], [0], [1], [0, 0, 1, 1], [], []>} : vector<256x128xf32>, vector<128x128xf32>, vector<256x128xf32> -> vector<256x128xf32>
    %c0_12 = arith.constant 0 : index
    %c0_13 = arith.constant 0 : index
    %c0_14 = arith.constant 0 : index
    %17 = vector.load %arg7[%c0_12, %c0_13, %c0_14] : memref<1x256x128xf32, #tpu.memory_space<vmem>>, vector<1x256x128xf32>
    %18 = vector.shape_cast %17 : vector<1x256x128xf32> to vector<256x128xf32>
    %19 = vector.shape_cast %16 : vector<256x128xf32> to vector<1x256x128xf32>
    tpu.vector_store %arg7[%c0_12, %c0_13, %c0_14], %19 {strides = array<i32>} : memref<1x256x128xf32, #tpu.memory_space<vmem>>, vector<1x256x128xf32>,
    %cst_15 = arith.constant dense<0.000000e+00> : vector<128xf32>
    %20 = vector.multi_reduction <add>, %16, %cst_15 [0] : vector<256x128xf32> to vector<128xf32>
    %21 = vector.shape_cast %20 : vector<128xf32> to vector<1x128xf32>
    %22 = arith.mulf %16, %16 : vector<256x128xf32>
    %cst_16 = arith.constant dense<0.000000e+00> : vector<128xf32>
    %23 = vector.multi_reduction <add>, %22, %cst_16 [0] : vector<256x128xf32> to vector<128xf32>
    %24 = vector.shape_cast %23 : vector<128xf32> to vector<1x128xf32>
    %c0_17 = arith.constant 0 : index
    %c0_18 = arith.constant 0 : index
    %c0_19 = arith.constant 0 : index
    %25 = vector.load %arg8[%c0_17, %c0_18, %c0_19] : memref<1x2x128xf32, #tpu.memory_space<vmem>>, vector<1x2x128xf32>
    %26 = vector.shape_cast %25 : vector<1x2x128xf32> to vector<2x128xf32>
    %27 = tpu.concatenate %21, %24 in 0 : vector<1x128xf32>, vector<1x128xf32> -> vector<2x128xf32>
    %28 = arith.addf %26, %27 : vector<2x128xf32>
    %c0_20 = arith.constant 0 : index
    %c0_21 = arith.constant 0 : index
    %c0_22 = arith.constant 0 : index
    %29 = vector.load %arg8[%c0_20, %c0_21, %c0_22] : memref<1x2x128xf32, #tpu.memory_space<vmem>>, vector<1x2x128xf32>
    %30 = vector.shape_cast %29 : vector<1x2x128xf32> to vector<2x128xf32>
    %31 = vector.shape_cast %28 : vector<2x128xf32> to vector<1x2x128xf32>
    tpu.vector_store %arg8[%c0_20, %c0_21, %c0_22], %31 {strides = array<i32>} : memref<1x2x128xf32, #tpu.memory_space<vmem>>, vector<1x2x128xf32>,
    %c0_23 = arith.constant 0 : index
    %c0_24 = arith.constant 0 : index
    %c0_25 = arith.constant 0 : index
    %32 = vector.load %arg9[%c0_23, %c0_24, %c0_25] : memref<1x1x128xf32, #tpu.memory_space<vmem>>, vector<1x1x128xf32>
    %33 = vector.shape_cast %32 : vector<1x1x128xf32> to vector<1x128xf32>
    %34 = arith.addf %33, %21 : vector<1x128xf32>
    %c0_26 = arith.constant 0 : index
    %c0_27 = arith.constant 0 : index
    %c0_28 = arith.constant 0 : index
    %35 = vector.load %arg9[%c0_26, %c0_27, %c0_28] : memref<1x1x128xf32, #tpu.memory_space<vmem>>, vector<1x1x128xf32>
    %36 = vector.shape_cast %35 : vector<1x1x128xf32> to vector<1x128xf32>
    %37 = vector.shape_cast %34 : vector<1x128xf32> to vector<1x1x128xf32>
    tpu.vector_store %arg9[%c0_26, %c0_27, %c0_28], %37 {strides = array<i32>} : memref<1x1x128xf32, #tpu.memory_space<vmem>>, vector<1x1x128xf32>,
    return
  }
  func.func @transform_0(%arg0: i32, %arg1: i32) -> (i32, i32, i32) {
    %c0_i32 = arith.constant 0 : i32
    %c0_i32_0 = arith.constant 0 : i32
    return %arg0, %arg1, %c0_i32 : i32, i32, i32
  }
  func.func @transform_1(%arg0: i32, %arg1: i32) -> (i32, i32, i32) {
    %c0_i32 = arith.constant 0 : i32
    %c0_i32_0 = arith.constant 0 : i32
    %c0_i32_1 = arith.constant 0 : i32
    %c0_i32_2 = arith.constant 0 : i32
    return %c0_i32, %c0_i32_0, %c0_i32_1 : i32, i32, i32
  }
  func.func @transform_2(%arg0: i32, %arg1: i32) -> (i32, i32) {
    %c0_i32 = arith.constant 0 : i32
    %c0_i32_0 = arith.constant 0 : i32
    %c0_i32_1 = arith.constant 0 : i32
    return %c0_i32, %c0_i32_0 : i32, i32
  }
  func.func @transform_3(%arg0: i32, %arg1: i32) -> (i32, i32) {
    %c0_i32 = arith.constant 0 : i32
    %c0_i32_0 = arith.constant 0 : i32
    %c0_i32_1 = arith.constant 0 : i32
    return %c0_i32, %c0_i32_0 : i32, i32
  }
  func.func @transform_4(%arg0: i32, %arg1: i32) -> (i32, i32) {
    %c0_i32 = arith.constant 0 : i32
    %c0_i32_0 = arith.constant 0 : i32
    %c0_i32_1 = arith.constant 0 : i32
    return %c0_i32, %c0_i32_0 : i32, i32
  }
  func.func @transform_5(%arg0: i32, %arg1: i32) -> (i32, i32, i32) {
    %c0_i32 = arith.constant 0 : i32
    %c0_i32_0 = arith.constant 0 : i32
    return %arg0, %arg1, %c0_i32 : i32, i32, i32
  }
  func.func @transform_6(%arg0: i32, %arg1: i32) -> (i32, i32, i32) {
    %c0_i32 = arith.constant 0 : i32
    %c0_i32_0 = arith.constant 0 : i32
    %c0_i32_1 = arith.constant 0 : i32
    return %arg0, %c0_i32, %c0_i32_0 : i32, i32, i32
  }
  func.func @transform_7(%arg0: i32, %arg1: i32) -> (i32, i32, i32) {
    %c0_i32 = arith.constant 0 : i32
    %c0_i32_0 = arith.constant 0 : i32
    %c0_i32_1 = arith.constant 0 : i32
    return %arg0, %c0_i32, %c0_i32_0 : i32, i32, i32
  }
}

module attributes {stable_mosaic.version = 11 : i64} {
  func.func @finalize_kernel(%arg0: i32, %arg1: i32, %arg2: memref<1x256x128xf32, #tpu.memory_space<vmem>>, %arg3: memref<1x256x128xf32, #tpu.memory_space<vmem>>, %arg4: memref<4x2x128xf32, #tpu.memory_space<vmem>>, %arg5: memref<1x1x128xf32, #tpu.memory_space<vmem>>, %arg6: memref<4x128xf32, #tpu.memory_space<vmem>>, %arg7: memref<128x128xf32, #tpu.memory_space<vmem>>, %arg8: memref<128x128xf32, #tpu.memory_space<vmem>>, %arg9: memref<1x256x128xf32, #tpu.memory_space<vmem>>, %arg10: memref<2x128xf32, #tpu.memory_space<vmem>>, %arg11: memref<1x128xf32, #tpu.memory_space<vmem>>) attributes {dimension_semantics = [#tpu.dimension_semantics<parallel>, #tpu.dimension_semantics<arbitrary>], iteration_bounds = array<i64: 4, 1>, scalar_prefetch = 0 : i64, scratch_operands = 2 : i64, tpu.core_type = #tpu.core_type<tc>, window_params = [{transform_indices = @transform_0, window_bounds = array<i64: 1, 256, 128>}, {transform_indices = @transform_1, window_bounds = array<i64: 1, 256, 128>}, {pipeline_mode = #tpu.pipeline_mode<synchronous>, transform_indices = @transform_2, window_bounds = array<i64: 4, 2, 128>}, {transform_indices = @transform_3, window_bounds = array<i64: 1, 1, 128>}, {pipeline_mode = #tpu.pipeline_mode<synchronous>, transform_indices = @transform_4, window_bounds = array<i64: 4, 128>}, {pipeline_mode = #tpu.pipeline_mode<synchronous>, transform_indices = @transform_5, window_bounds = array<i64: 128, 128>}, {pipeline_mode = #tpu.pipeline_mode<synchronous>, transform_indices = @transform_6, window_bounds = array<i64: 128, 128>}, {transform_indices = @transform_7, window_bounds = array<i64: 1, 256, 128>}]} {
    %c0_i32 = arith.constant 0 : i32
    %0 = arith.cmpi eq, %arg1, %c0_i32 : i32
    %1 = arith.extui %0 : i1 to i32
    %c0_i32_0 = arith.constant 0 : i32
    %2 = arith.cmpi ne, %1, %c0_i32_0 : i32
    scf.if %2 {
      %c0_14 = arith.constant 0 : index
      %c0_15 = arith.constant 0 : index
      %c0_16 = arith.constant 0 : index
      %22 = vector.load %arg4[%c0_14, %c0_15, %c0_16] : memref<4x2x128xf32, #tpu.memory_space<vmem>>, vector<4x2x128xf32>
      %cst_17 = arith.constant dense<0.000000e+00> : vector<2x128xf32>
      %23 = vector.multi_reduction <add>, %22, %cst_17 [0] : vector<4x2x128xf32> to vector<2x128xf32>
      %24 = vector.extract_strided_slice %23 {offsets = [0, 0], sizes = [1, 128], strides = [1, 1]} : vector<2x128xf32> to vector<1x128xf32>
      %cst_18 = arith.constant 9.765625E-4 : f32
      %25 = vector.broadcast %cst_18 : f32 to vector<1x128xf32>
      %26 = arith.mulf %24, %25 : vector<1x128xf32>
      %27 = vector.extract_strided_slice %23 {offsets = [1, 0], sizes = [1, 128], strides = [1, 1]} : vector<2x128xf32> to vector<1x128xf32>
      %cst_19 = arith.constant 9.765625E-4 : f32
      %28 = vector.broadcast %cst_19 : f32 to vector<1x128xf32>
      %29 = arith.mulf %27, %28 : vector<1x128xf32>
      %30 = arith.mulf %26, %26 : vector<1x128xf32>
      %31 = arith.subf %29, %30 : vector<1x128xf32>
      %cst_20 = arith.constant 9.99999974E-6 : f32
      %32 = vector.broadcast %cst_20 : f32 to vector<1x128xf32>
      %33 = arith.addf %31, %32 : vector<1x128xf32>
      %34 = math.rsqrt %33 : vector<1x128xf32>
      %c2 = arith.constant 2 : index
      %c0_21 = arith.constant 0 : index
      %35 = vector.load %arg6[%c2, %c0_21] : memref<4x128xf32, #tpu.memory_space<vmem>>, vector<1x128xf32>
      %36 = arith.mulf %34, %35 : vector<1x128xf32>
      %c3 = arith.constant 3 : index
      %c0_22 = arith.constant 0 : index
      %37 = vector.load %arg6[%c3, %c0_22] : memref<4x128xf32, #tpu.memory_space<vmem>>, vector<1x128xf32>
      %38 = arith.mulf %26, %36 : vector<1x128xf32>
      %39 = arith.subf %37, %38 : vector<1x128xf32>
      %40 = tpu.concatenate %36, %39 in 0 : vector<1x128xf32>, vector<1x128xf32> -> vector<2x128xf32>
      %c0_23 = arith.constant 0 : index
      %c0_24 = arith.constant 0 : index
      %41 = vector.load %arg10[%c0_23, %c0_24] : memref<2x128xf32, #tpu.memory_space<vmem>>, vector<2x128xf32>
      tpu.vector_store %arg10[%c0_23, %c0_24], %40 {strides = array<i32>} : memref<2x128xf32, #tpu.memory_space<vmem>>, vector<2x128xf32>,
      %c0_25 = arith.constant 0 : index
      %c0_26 = arith.constant 0 : index
      %c0_27 = arith.constant 0 : index
      %42 = vector.load %arg5[%c0_25, %c0_26, %c0_27] : memref<1x1x128xf32, #tpu.memory_space<vmem>>, vector<1x1x128xf32>
      %43 = vector.shape_cast %42 : vector<1x1x128xf32> to vector<1x128xf32>
      %cst_28 = arith.constant 3.906250e-03 : f32
      %44 = vector.broadcast %cst_28 : f32 to vector<1x128xf32>
      %45 = arith.mulf %43, %44 : vector<1x128xf32>
      %46 = arith.mulf %45, %36 : vector<1x128xf32>
      %47 = arith.addf %46, %39 : vector<1x128xf32>
      %c0_29 = arith.constant 0 : index
      %c0_30 = arith.constant 0 : index
      %48 = vector.load %arg7[%c0_29, %c0_30] : memref<128x128xf32, #tpu.memory_space<vmem>>, vector<128x128xf32>
      %cst_31 = arith.constant dense<0.000000e+00> : vector<1x128xf32>
      %49 = tpu.matmul %47, %48, %cst_31 {dimension_numbers = #tpu.dot_dimension_numbers<[1], [0], [0], [1], [0, 0, 1, 1], [], []>} : vector<1x128xf32>, vector<128x128xf32>, vector<1x128xf32> -> vector<1x128xf32>
      %cst_32 = arith.constant 0.000000e+00 : f32
      %50 = vector.broadcast %cst_32 : f32 to vector<1x128xf32>
      %51 = arith.maximumf %49, %50 : vector<1x128xf32>
      %c0_33 = arith.constant 0 : index
      %c0_34 = arith.constant 0 : index
      %52 = vector.load %arg8[%c0_33, %c0_34] : memref<128x128xf32, #tpu.memory_space<vmem>>, vector<128x128xf32>
      %cst_35 = arith.constant dense<0.000000e+00> : vector<1x128xf32>
      %53 = tpu.matmul %51, %52, %cst_35 {dimension_numbers = #tpu.dot_dimension_numbers<[1], [0], [0], [1], [0, 0, 1, 1], [], []>} : vector<1x128xf32>, vector<128x128xf32>, vector<1x128xf32> -> vector<1x128xf32>
      %54 = arith.negf %53 : vector<1x128xf32>
      %55 = math.exp %54 : vector<1x128xf32>
      %cst_36 = arith.constant 1.000000e+00 : f32
      %56 = vector.broadcast %cst_36 : f32 to vector<1x128xf32>
      %57 = arith.addf %56, %55 : vector<1x128xf32>
      %58 = arith.divf %56, %57 : vector<1x128xf32>
      %c0_37 = arith.constant 0 : index
      %c0_38 = arith.constant 0 : index
      %59 = vector.load %arg11[%c0_37, %c0_38] : memref<1x128xf32, #tpu.memory_space<vmem>>, vector<1x128xf32>
      tpu.vector_store %arg11[%c0_37, %c0_38], %58 {strides = array<i32>} : memref<1x128xf32, #tpu.memory_space<vmem>>, vector<1x128xf32>,
    } else {
    }
    %c0 = arith.constant 0 : index
    %c0_1 = arith.constant 0 : index
    %c0_2 = arith.constant 0 : index
    %3 = vector.load %arg2[%c0, %c0_1, %c0_2] : memref<1x256x128xf32, #tpu.memory_space<vmem>>, vector<1x256x128xf32>
    %4 = vector.shape_cast %3 : vector<1x256x128xf32> to vector<256x128xf32>
    %c0_3 = arith.constant 0 : index
    %c0_4 = arith.constant 0 : index
    %5 = vector.load %arg10[%c0_3, %c0_4] : memref<2x128xf32, #tpu.memory_space<vmem>>, vector<1x128xf32>
    %6 = vector.broadcast %5 : vector<1x128xf32> to vector<256x128xf32>
    %7 = arith.mulf %4, %6 : vector<256x128xf32>
    %c1 = arith.constant 1 : index
    %c0_5 = arith.constant 0 : index
    %8 = vector.load %arg10[%c1, %c0_5] : memref<2x128xf32, #tpu.memory_space<vmem>>, vector<1x128xf32>
    %9 = vector.broadcast %8 : vector<1x128xf32> to vector<256x128xf32>
    %10 = arith.addf %7, %9 : vector<256x128xf32>
    %c0_6 = arith.constant 0 : index
    %c0_7 = arith.constant 0 : index
    %11 = vector.load %arg11[%c0_6, %c0_7] : memref<1x128xf32, #tpu.memory_space<vmem>>, vector<1x128xf32>
    %12 = vector.broadcast %11 : vector<1x128xf32> to vector<256x128xf32>
    %13 = arith.mulf %10, %12 : vector<256x128xf32>
    %c0_8 = arith.constant 0 : index
    %c0_9 = arith.constant 0 : index
    %c0_10 = arith.constant 0 : index
    %14 = vector.load %arg3[%c0_8, %c0_9, %c0_10] : memref<1x256x128xf32, #tpu.memory_space<vmem>>, vector<1x256x128xf32>
    %15 = vector.shape_cast %14 : vector<1x256x128xf32> to vector<256x128xf32>
    %16 = arith.addf %13, %15 : vector<256x128xf32>
    %cst = arith.constant 0.000000e+00 : f32
    %17 = vector.broadcast %cst : f32 to vector<256x128xf32>
    %18 = arith.maximumf %16, %17 : vector<256x128xf32>
    %c0_11 = arith.constant 0 : index
    %c0_12 = arith.constant 0 : index
    %c0_13 = arith.constant 0 : index
    %19 = vector.load %arg9[%c0_11, %c0_12, %c0_13] : memref<1x256x128xf32, #tpu.memory_space<vmem>>, vector<1x256x128xf32>
    %20 = vector.shape_cast %19 : vector<1x256x128xf32> to vector<256x128xf32>
    %21 = vector.shape_cast %18 : vector<256x128xf32> to vector<1x256x128xf32>
    tpu.vector_store %arg9[%c0_11, %c0_12, %c0_13], %21 {strides = array<i32>} : memref<1x256x128xf32, #tpu.memory_space<vmem>>, vector<1x256x128xf32>,
    return
  }
  func.func @transform_0(%arg0: i32, %arg1: i32) -> (i32, i32, i32) {
    %c0_i32 = arith.constant 0 : i32
    %c0_i32_0 = arith.constant 0 : i32
    return %arg0, %arg1, %c0_i32 : i32, i32, i32
  }
  func.func @transform_1(%arg0: i32, %arg1: i32) -> (i32, i32, i32) {
    %c0_i32 = arith.constant 0 : i32
    %c0_i32_0 = arith.constant 0 : i32
    return %arg0, %arg1, %c0_i32 : i32, i32, i32
  }
  func.func @transform_2(%arg0: i32, %arg1: i32) -> (i32, i32, i32) {
    %c0_i32 = arith.constant 0 : i32
    %c0_i32_0 = arith.constant 0 : i32
    %c0_i32_1 = arith.constant 0 : i32
    %c0_i32_2 = arith.constant 0 : i32
    return %c0_i32, %c0_i32_0, %c0_i32_1 : i32, i32, i32
  }
  func.func @transform_3(%arg0: i32, %arg1: i32) -> (i32, i32, i32) {
    %c0_i32 = arith.constant 0 : i32
    %c0_i32_0 = arith.constant 0 : i32
    %c0_i32_1 = arith.constant 0 : i32
    return %arg0, %c0_i32, %c0_i32_0 : i32, i32, i32
  }
  func.func @transform_4(%arg0: i32, %arg1: i32) -> (i32, i32) {
    %c0_i32 = arith.constant 0 : i32
    %c0_i32_0 = arith.constant 0 : i32
    %c0_i32_1 = arith.constant 0 : i32
    return %c0_i32, %c0_i32_0 : i32, i32
  }
  func.func @transform_5(%arg0: i32, %arg1: i32) -> (i32, i32) {
    %c0_i32 = arith.constant 0 : i32
    %c0_i32_0 = arith.constant 0 : i32
    %c0_i32_1 = arith.constant 0 : i32
    return %c0_i32, %c0_i32_0 : i32, i32
  }
  func.func @transform_6(%arg0: i32, %arg1: i32) -> (i32, i32) {
    %c0_i32 = arith.constant 0 : i32
    %c0_i32_0 = arith.constant 0 : i32
    %c0_i32_1 = arith.constant 0 : i32
    return %c0_i32, %c0_i32_0 : i32, i32
  }
  func.func @transform_7(%arg0: i32, %arg1: i32) -> (i32, i32, i32) {
    %c0_i32 = arith.constant 0 : i32
    %c0_i32_0 = arith.constant 0 : i32
    return %arg0, %arg1, %c0_i32 : i32, i32, i32
  }
}

</mosaic_0001>

<llo_original>
// kernel: se_basic_block.3
$region0: #{se_basic_block.3}
  #allocation0 [shape = 'u32[]', space=smem, size = 0x4, offset = 0x4, fixed_abs, tag = 'smem constant byte address 0x4 - core index']
  #allocation1 [shape = 'u32[72,128]{1,0:T(1,128)}', space=vmem, size = 0x9000, scoped, tag = 'internal scratch']
  %s0 = inlined_call_operand.vmem [shape: f32[1024,128], index: 0, kind: input, shape index: {}]
  %s1 = inlined_call_operand.vmem [shape: f32[128,128], index: 1, kind: input, shape index: {}]
  %s2 = inlined_call_operand.vmem [shape: f32[2,2,128], index: 2, kind: output, shape index: {}]
  %s3 = sld [smem:[#allocation0]]
  $region41: #{se_basic_block.3} parent=0
    _
  %s5 = ssub.s32 1, %s3
  %s6 = scalar_select 0, %s5, %s3
  loop: start=0, step=1, limit=4
  $region2: #{se_basic_block.3} parent=0 // loop_pre_header
    _
  $region3: #{se_basic_block.3} parent=0 // loop_header
    %s8 = sphi 0, %s12
    %p9 = scmp.ge.s32.totalorder %s8, 4
    %s18 = sphi 0, %s20
    %s21 = sphi 0, %s18
    %s22 = sphi 0, %s21
    %s38 = sphi 0, %s22
    %s42 = sphi 0, %s42
    %s44 = sphi 0, %s42
    %s45 = sphi 0, %s44
    %s59 = sphi 0, %s45
    %s65 = sphi 0, %s67
    %s68 = sphi 0, %s65
    %s69 = sphi 0, %s68
    %s85 = sphi 0, %s69
  $region4: #{se_basic_block.3} parent=0 // loop_header_branch
    %11 = sbr.rel (%p9) target = $region8
  $region5: #{se_basic_block.3} parent=0 // loop_body
    %s13 = ssub.s32 %s8, 1
    %s14 = ssub.s32 %s8, 2
    %s15 = sadd.s32 %s8, 1
    %s16 = ssub.s32 %s8, %s15
    %p17 = scmp.eq.s32.totalorder %s16, 0
    %s19 = sadd.s32 %s18, 1
    %s20 = scalar_select %p17, %s18, %s19
    %p23 = pneg %p17
    %p24 = scmp.eq.s32.totalorder %s8, 1
    %p25 = por %p23, %p24
    %p26 = scmp.ne.s32.totalorder %s18, %s21
    %p27 = scmp.eq.s32.totalorder %s8, 0
    %p28 = por %p26, %p27
    %p29 = scmp.ne.s32.totalorder %s18, %s21
    %p30 = scmp.eq.s32.totalorder %s13, 1
    %p31 = por %p29, %p30
    %p32 = scmp.ne.s32.totalorder %s21, %s22
    %p33 = scmp.eq.s32.totalorder %s13, 0
    %p34 = por %p32, %p33
    %p35 = scmp.ne.s32.totalorder %s21, %s22
    %p36 = scmp.eq.s32.totalorder %s14, 1
    %p37 = por %p35, %p36
    %p39 = scmp.ne.s32.totalorder %s22, %s38
    %p40 = scmp.eq.s32.totalorder %s14, 0
    %p41 = por %p39, %p40
    %s43 = sadd.s32 %s42, 1
    %p46 = scmp.eq.s32.totalorder %s8, 1
    %p47 = scmp.ne.s32.totalorder %s42, %s44
    %p48 = scmp.eq.s32.totalorder %s8, 0
    %p49 = por %p47, %p48
    %p50 = scmp.ne.s32.totalorder %s42, %s44
    %p51 = scmp.eq.s32.totalorder %s13, 1
    %p52 = por %p50, %p51
    %p53 = scmp.ne.s32.totalorder %s44, %s45
    %p54 = scmp.eq.s32.totalorder %s13, 0
    %p55 = por %p53, %p54
    %p56 = scmp.ne.s32.totalorder %s44, %s45
    %p57 = scmp.eq.s32.totalorder %s14, 1
    %p58 = por %p56, %p57
    %p60 = scmp.ne.s32.totalorder %s45, %s59
    %p61 = scmp.eq.s32.totalorder %s14, 0
    %p62 = por %p60, %p61
    %s63 = ssub.s32 %s8, %s15
    %p64 = scmp.eq.s32.totalorder %s63, 0
    %s66 = sadd.s32 %s65, 1
    %s67 = scalar_select %p64, %s65, %s66
    %p70 = pneg %p64
    %p71 = scmp.eq.s32.totalorder %s8, 1
    %p72 = por %p70, %p71
    %p73 = scmp.ne.s32.totalorder %s65, %s68
    %p74 = scmp.eq.s32.totalorder %s8, 0
    %p75 = por %p73, %p74
    %p76 = scmp.ne.s32.totalorder %s65, %s68
    %p77 = scmp.eq.s32.totalorder %s13, 1
    %p78 = por %p76, %p77
    %p79 = scmp.ne.s32.totalorder %s68, %s69
    %p80 = scmp.eq.s32.totalorder %s13, 0
    %p81 = por %p79, %p80
    %p82 = scmp.ne.s32.totalorder %s68, %s69
    %p83 = scmp.eq.s32.totalorder %s14, 1
    %p84 = por %p82, %p83
    %p86 = scmp.ne.s32.totalorder %s69, %s85
    %p87 = scmp.eq.s32.totalorder %s14, 0
    %p88 = por %p86, %p87
    %p89 = scmp.le.s32.totalorder 1, %s8
    %p90 = scmp.lt.s32.totalorder %s8, 3
    %p91 = pnand %p89, %p90
    %p92 = pneg %p91
    // Predicated region
    $region9: #{se_basic_block.3} parent=5 // pred_check
      _
    $region10: #{se_basic_block.3} parent=5 // pred_check_branch
      %94 = sbr.rel (%p91) target = $region12
    $region11: #{se_basic_block.3} parent=5 // pred_region
      %s95 = ssub.s32 %s8, 1
      // Predicated region
      $region13: #{se_basic_block.3} parent=11 // pred_check
        %p96 = pneg %p55
      $region14: #{se_basic_block.3} parent=11 // pred_check_branch
        %98 = sbr.rel (%p96) target = $region16
      $region15: #{se_basic_block.3} parent=11 // pred_region
        _
      $region16: #{se_basic_block.3} parent=11 // pred_fallthru
        _
    $region12: #{se_basic_block.3} parent=5 // pred_fallthru
      _
    %p99 = scmp.lt.s32.totalorder %s8, 2
    // Predicated region
    $region17: #{se_basic_block.3} parent=5 // pred_check
      %p100 = pneg %p99
    $region18: #{se_basic_block.3} parent=5 // pred_check_branch
      %102 = sbr.rel (%p100) target = $region20
    $region19: #{se_basic_block.3} parent=5 // pred_region
      // Predicated region
      $region21: #{se_basic_block.3} parent=19 // pred_check
        %p103 = pneg %p28
      $region22: #{se_basic_block.3} parent=19 // pred_check_branch
        %105 = sbr.rel (%p103) target = $region24
      $region23: #{se_basic_block.3} parent=19 // pred_region
        %s106 = smul.u32 64, %s8
        %p107 = scmp.lt.s32.totalorder %s106, 127
        %s108 = scalar_select %p107, %s106, 127
        %s109 = smul.addr %s108, 8
        %s110 = scalar_lea.vmem %s0, %s109
        %s111 = smul.u32 64, %s8
      $region24: #{se_basic_block.3} parent=19 // pred_fallthru
        _
    $region20: #{se_basic_block.3} parent=5 // pred_fallthru
      _
    %p112 = scmp.le.s32.totalorder 1, %s8
    %p113 = scmp.lt.s32.totalorder %s8, 3
    %p114 = pnand %p112, %p113
    %p115 = pneg %p114
    // Predicated region
    $region25: #{se_basic_block.3} parent=5 // pred_check
      _
    $region26: #{se_basic_block.3} parent=5 // pred_check_branch
      %117 = sbr.rel (%p114) target = $region28
    $region27: #{se_basic_block.3} parent=5 // pred_region
      %s118 = ssub.s32 %s8, 1
      %s119 = smul.u32 64, %s13
      %p120 = scmp.lt.s32.totalorder %s119, 127
      %s121 = scalar_select %p120, %s119, 127
      %s122 = smul.addr %s121, 8
      %s123 = scalar_lea.vmem %s0, %s122
      %p124 = pneg %p34
      %p125 = pneg %p31
      %p126 = pneg %p55
      %p127 = pneg %p52
      %p128 = pneg %p81
      %p129 = pneg %p78
      %p130 = scmp.lt.s32.totalorder %s13, 1
      %s131 = scalar_select %p130, %s13, 1
      %s132 = smul.addr %s131, 2
      %s133 = scalar_lea.vmem %s2, %s132
      %s134 = smul.u32 64, %s13
      %p135 = scmp.lt.s32.totalorder %s134, 127
      %s136 = scalar_select %p135, %s134, 127
      %s137 = smul.addr %s136, 8
      %s138 = scalar_lea.vmem %s0, %s137
      %s139 = smul.u32 64, %s13
      %p140 = scmp.lt.s32.totalorder %s13, 1
      %s141 = scalar_select %p140, %s13, 1
      %s142 = smul.addr %s141, 2
      %s143 = scalar_lea.vmem %s2, %s142
      %v144 = vld [vmem:[%s138] sm:$0xff]
      %v145 = vld [vmem:[%s138 + $0x8] sm:$0xff]
      %v146 = vld [vmem:[%s138 + $0x10] sm:$0xff]
      %v147 = vld [vmem:[%s138 + $0x18] sm:$0xff]
      %v148 = vld [vmem:[%s138 + $0x20] sm:$0xff]
      %v149 = vld [vmem:[%s138 + $0x28] sm:$0xff]
      %v150 = vld [vmem:[%s138 + $0x30] sm:$0xff]
      %v151 = vld [vmem:[%s138 + $0x38] sm:$0xff]
      %v152 = vld [vmem:[%s138 + $0x40] sm:$0xff]
      %v153 = vld [vmem:[%s138 + $0x48] sm:$0xff]
      %v154 = vld [vmem:[%s138 + $0x50] sm:$0xff]
      %v155 = vld [vmem:[%s138 + $0x58] sm:$0xff]
      %v156 = vld [vmem:[%s138 + $0x60] sm:$0xff]
      %v157 = vld [vmem:[%s138 + $0x68] sm:$0xff]
      %v158 = vld [vmem:[%s138 + $0x70] sm:$0xff]
      %v159 = vld [vmem:[%s138 + $0x78] sm:$0xff]
      %v160 = vld [vmem:[%s138 + $0x80] sm:$0xff]
      %v161 = vld [vmem:[%s138 + $0x88] sm:$0xff]
      %v162 = vld [vmem:[%s138 + $0x90] sm:$0xff]
      %v163 = vld [vmem:[%s138 + $0x98] sm:$0xff]
      %v164 = vld [vmem:[%s138 + $0xa0] sm:$0xff]
      %v165 = vld [vmem:[%s138 + $0xa8] sm:$0xff]
      %v166 = vld [vmem:[%s138 + $0xb0] sm:$0xff]
      %v167 = vld [vmem:[%s138 + $0xb8] sm:$0xff]
      %v168 = vld [vmem:[%s138 + $0xc0] sm:$0xff]
      %v169 = vld [vmem:[%s138 + $0xc8] sm:$0xff]
      %v170 = vld [vmem:[%s138 + $0xd0] sm:$0xff]
      %v171 = vld [vmem:[%s138 + $0xd8] sm:$0xff]
      %v172 = vld [vmem:[%s138 + $0xe0] sm:$0xff]
      %v173 = vld [vmem:[%s138 + $0xe8] sm:$0xff]
      %v174 = vld [vmem:[%s138 + $0xf0] sm:$0xff]
      %v175 = vld [vmem:[%s138 + $0xf8] sm:$0xff]
      %v176 = vld [vmem:[%s138 + $0x100] sm:$0xff]
      %v177 = vld [vmem:[%s138 + $0x108] sm:$0xff]
      %v178 = vld [vmem:[%s138 + $0x110] sm:$0xff]
      %v179 = vld [vmem:[%s138 + $0x118] sm:$0xff]
      %v180 = vld [vmem:[%s138 + $0x120] sm:$0xff]
      %v181 = vld [vmem:[%s138 + $0x128] sm:$0xff]
      %v182 = vld [vmem:[%s138 + $0x130] sm:$0xff]
      %v183 = vld [vmem:[%s138 + $0x138] sm:$0xff]
      %v184 = vld [vmem:[%s138 + $0x140] sm:$0xff]
      %v185 = vld [vmem:[%s138 + $0x148] sm:$0xff]
      %v186 = vld [vmem:[%s138 + $0x150] sm:$0xff]
      %v187 = vld [vmem:[%s138 + $0x158] sm:$0xff]
      %v188 = vld [vmem:[%s138 + $0x160] sm:$0xff]
      %v189 = vld [vmem:[%s138 + $0x168] sm:$0xff]
      %v190 = vld [vmem:[%s138 + $0x170] sm:$0xff]
      %v191 = vld [vmem:[%s138 + $0x178] sm:$0xff]
      %v192 = vld [vmem:[%s138 + $0x180] sm:$0xff]
      %v193 = vld [vmem:[%s138 + $0x188] sm:$0xff]
      %v194 = vld [vmem:[%s138 + $0x190] sm:$0xff]
      %v195 = vld [vmem:[%s138 + $0x198] sm:$0xff]
      %v196 = vld [vmem:[%s138 + $0x1a0] sm:$0xff]
      %v197 = vld [vmem:[%s138 + $0x1a8] sm:$0xff]
      %v198 = vld [vmem:[%s138 + $0x1b0] sm:$0xff]
      %v199 = vld [vmem:[%s138 + $0x1b8] sm:$0xff]
      %v200 = vld [vmem:[%s138 + $0x1c0] sm:$0xff]
      %v201 = vld [vmem:[%s138 + $0x1c8] sm:$0xff]
      %v202 = vld [vmem:[%s138 + $0x1d0] sm:$0xff]
      %v203 = vld [vmem:[%s138 + $0x1d8] sm:$0xff]
      %v204 = vld [vmem:[%s138 + $0x1e0] sm:$0xff]
      %v205 = vld [vmem:[%s138 + $0x1e8] sm:$0xff]
      %v206 = vld [vmem:[%s138 + $0x1f0] sm:$0xff]
      %v207 = vld [vmem:[%s138 + $0x1f8] sm:$0xff]
      %v208 = vld [vmem:[%s1] sm:$0xff]
      %v209 = vld [vmem:[%s1 + $0x8] sm:$0xff]
      %v210 = vld [vmem:[%s1 + $0x10] sm:$0xff]
      %v211 = vld [vmem:[%s1 + $0x18] sm:$0xff]
      %v212 = vld [vmem:[%s1 + $0x20] sm:$0xff]
      %v213 = vld [vmem:[%s1 + $0x28] sm:$0xff]
      %v214 = vld [vmem:[%s1 + $0x30] sm:$0xff]
      %v215 = vld [vmem:[%s1 + $0x38] sm:$0xff]
      %v216 = vld [vmem:[%s1 + $0x40] sm:$0xff]
      %v217 = vld [vmem:[%s1 + $0x48] sm:$0xff]
      %v218 = vld [vmem:[%s1 + $0x50] sm:$0xff]
      %v219 = vld [vmem:[%s1 + $0x58] sm:$0xff]
      %v220 = vld [vmem:[%s1 + $0x60] sm:$0xff]
      %v221 = vld [vmem:[%s1 + $0x68] sm:$0xff]
      %v222 = vld [vmem:[%s1 + $0x70] sm:$0xff]
      %v223 = vld [vmem:[%s1 + $0x78] sm:$0xff]
      %224 = vmatpush.msra.mxu0 %v223
      %225 = vmatpush.msra.mxu0 %v222
      %226 = vmatpush.msra.mxu0 %v221
      %227 = vmatpush.msra.mxu0 %v220
      %228 = vmatpush.msra.mxu0 %v219
      %229 = vmatpush.msra.mxu0 %v218
      %230 = vmatpush.msra.mxu0 %v217
      %231 = vmatpush.msra.mxu0 %v216
      %232 = vmatpush.msra.mxu0 %v215
      %233 = vmatpush.msra.mxu0 %v214
      %234 = vmatpush.msra.mxu0 %v213
      %235 = vmatpush.msra.mxu0 %v212
      %236 = vmatpush.msra.mxu0 %v211
      %237 = vmatpush.msra.mxu0 %v210
      %238 = vmatpush.msra.mxu0 %v209
      %239 = vmatpush.msra.mxu0 %v208
      %240 = vmatmul.f32.gmra.mxu0 %v144
      %v241 = vpop.f32.mrf.mxu0
      %v242 = vadd.f32 0.0, %v241
      %243 = vmatmul.f32.gmra.mxu0 %v145
      %v244 = vpop.f32.mrf.mxu0
      %v245 = vadd.f32 0.0, %v244
      %246 = vmatmul.f32.gmra.mxu0 %v146
      %v247 = vpop.f32.mrf.mxu0
      %v248 = vadd.f32 0.0, %v247
      %249 = vmatmul.f32.gmra.mxu0 %v147
      %v250 = vpop.f32.mrf.mxu0
      %v251 = vadd.f32 0.0, %v250
      %252 = vmatmul.f32.gmra.mxu0 %v148
      %v253 = vpop.f32.mrf.mxu0
      %v254 = vadd.f32 0.0, %v253
      %255 = vmatmul.f32.gmra.mxu0 %v149
      %v256 = vpop.f32.mrf.mxu0
      %v257 = vadd.f32 0.0, %v256
      %258 = vmatmul.f32.gmra.mxu0 %v150
      %v259 = vpop.f32.mrf.mxu0
      %v260 = vadd.f32 0.0, %v259
      %261 = vmatmul.f32.gmra.mxu0 %v151
      %v262 = vpop.f32.mrf.mxu0
      %v263 = vadd.f32 0.0, %v262
      %264 = vmatmul.f32.gmra.mxu0 %v152
      %v265 = vpop.f32.mrf.mxu0
      %v266 = vadd.f32 0.0, %v265
      %267 = vmatmul.f32.gmra.mxu0 %v153
      %v268 = vpop.f32.mrf.mxu0
      %v269 = vadd.f32 0.0, %v268
      %270 = vmatmul.f32.gmra.mxu0 %v154
      %v271 = vpop.f32.mrf.mxu0
      %v272 = vadd.f32 0.0, %v271
      %273 = vmatmul.f32.gmra.mxu0 %v155
      %v274 = vpop.f32.mrf.mxu0
      %v275 = vadd.f32 0.0, %v274
      %276 = vmatmul.f32.gmra.mxu0 %v156
      %v277 = vpop.f32.mrf.mxu0
      %v278 = vadd.f32 0.0, %v277
      %279 = vmatmul.f32.gmra.mxu0 %v157
      %v280 = vpop.f32.mrf.mxu0
      %v281 = vadd.f32 0.0, %v280
      %282 = vmatmul.f32.gmra.mxu0 %v158
      %v283 = vpop.f32.mrf.mxu0
      %v284 = vadd.f32 0.0, %v283
      %285 = vmatmul.f32.gmra.mxu0 %v159
      %v286 = vpop.f32.mrf.mxu0
      %v287 = vadd.f32 0.0, %v286
      %288 = vmatmul.f32.gmra.mxu0 %v160
      %v289 = vpop.f32.mrf.mxu0
      %v290 = vadd.f32 0.0, %v289
      %291 = vmatmul.f32.gmra.mxu0 %v161
      %v292 = vpop.f32.mrf.mxu0
      %v293 = vadd.f32 0.0, %v292
      %294 = vmatmul.f32.gmra.mxu0 %v162
      %v295 = vpop.f32.mrf.mxu0
      %v296 = vadd.f32 0.0, %v295
      %297 = vmatmul.f32.gmra.mxu0 %v163
      %v298 = vpop.f32.mrf.mxu0
      %v299 = vadd.f32 0.0, %v298
      %300 = vmatmul.f32.gmra.mxu0 %v164
      %v301 = vpop.f32.mrf.mxu0
      %v302 = vadd.f32 0.0, %v301
      %303 = vmatmul.f32.gmra.mxu0 %v165
      %v304 = vpop.f32.mrf.mxu0
      %v305 = vadd.f32 0.0, %v304
      %306 = vmatmul.f32.gmra.mxu0 %v166
      %v307 = vpop.f32.mrf.mxu0
      %v308 = vadd.f32 0.0, %v307
      %309 = vmatmul.f32.gmra.mxu0 %v167
      %v310 = vpop.f32.mrf.mxu0
      %v311 = vadd.f32 0.0, %v310
      %312 = vmatmul.f32.gmra.mxu0 %v168
      %v313 = vpop.f32.mrf.mxu0
      %v314 = vadd.f32 0.0, %v313
      %315 = vmatmul.f32.gmra.mxu0 %v169
      %v316 = vpop.f32.mrf.mxu0
      %v317 = vadd.f32 0.0, %v316
      %318 = vmatmul.f32.gmra.mxu0 %v170
      %v319 = vpop.f32.mrf.mxu0
      %v320 = vadd.f32 0.0, %v319
      %321 = vmatmul.f32.gmra.mxu0 %v171
      %v322 = vpop.f32.mrf.mxu0
      %v323 = vadd.f32 0.0, %v322
      %324 = vmatmul.f32.gmra.mxu0 %v172
      %v325 = vpop.f32.mrf.mxu0
      %v326 = vadd.f32 0.0, %v325
      %327 = vmatmul.f32.gmra.mxu0 %v173
      %v328 = vpop.f32.mrf.mxu0
      %v329 = vadd.f32 0.0, %v328
      %330 = vmatmul.f32.gmra.mxu0 %v174
      %v331 = vpop.f32.mrf.mxu0
      %v332 = vadd.f32 0.0, %v331
      %333 = vmatmul.f32.gmra.mxu0 %v175
      %v334 = vpop.f32.mrf.mxu0
      %v335 = vadd.f32 0.0, %v334
      %336 = vmatmul.f32.gmra.mxu0 %v176
      %v337 = vpop.f32.mrf.mxu0
      %v338 = vadd.f32 0.0, %v337
      %339 = vmatmul.f32.gmra.mxu0 %v177
      %v340 = vpop.f32.mrf.mxu0
      %v341 = vadd.f32 0.0, %v340
      %342 = vmatmul.f32.gmra.mxu0 %v178
      %v343 = vpop.f32.mrf.mxu0
      %v344 = vadd.f32 0.0, %v343
      %345 = vmatmul.f32.gmra.mxu0 %v179
      %v346 = vpop.f32.mrf.mxu0
      %v347 = vadd.f32 0.0, %v346
      %348 = vmatmul.f32.gmra.mxu0 %v180
      %v349 = vpop.f32.mrf.mxu0
      %v350 = vadd.f32 0.0, %v349
      %351 = vmatmul.f32.gmra.mxu0 %v181
      %v352 = vpop.f32.mrf.mxu0
      %v353 = vadd.f32 0.0, %v352
      %354 = vmatmul.f32.gmra.mxu0 %v182
      %v355 = vpop.f32.mrf.mxu0
      %v356 = vadd.f32 0.0, %v355
      %357 = vmatmul.f32.gmra.mxu0 %v183
      %v358 = vpop.f32.mrf.mxu0
      %v359 = vadd.f32 0.0, %v358
      %360 = vmatmul.f32.gmra.mxu0 %v184
      %v361 = vpop.f32.mrf.mxu0
      %v362 = vadd.f32 0.0, %v361
      %363 = vmatmul.f32.gmra.mxu0 %v185
      %v364 = vpop.f32.mrf.mxu0
      %v365 = vadd.f32 0.0, %v364
      %366 = vmatmul.f32.gmra.mxu0 %v186
      %v367 = vpop.f32.mrf.mxu0
      %v368 = vadd.f32 0.0, %v367
      %369 = vmatmul.f32.gmra.mxu0 %v187
      %v370 = vpop.f32.mrf.mxu0
      %v371 = vadd.f32 0.0, %v370
      %372 = vmatmul.f32.gmra.mxu0 %v188
      %v373 = vpop.f32.mrf.mxu0
      %v374 = vadd.f32 0.0, %v373
      %375 = vmatmul.f32.gmra.mxu0 %v189
      %v376 = vpop.f32.mrf.mxu0
      %v377 = vadd.f32 0.0, %v376
      %378 = vmatmul.f32.gmra.mxu0 %v190
      %v379 = vpop.f32.mrf.mxu0
      %v380 = vadd.f32 0.0, %v379
      %381 = vmatmul.f32.gmra.mxu0 %v191
      %v382 = vpop.f32.mrf.mxu0
      %v383 = vadd.f32 0.0, %v382
      %384 = vmatmul.f32.gmra.mxu0 %v192
      %v385 = vpop.f32.mrf.mxu0
      %v386 = vadd.f32 0.0, %v385
      %387 = vmatmul.f32.gmra.mxu0 %v193
      %v388 = vpop.f32.mrf.mxu0
      %v389 = vadd.f32 0.0, %v388
      %390 = vmatmul.f32.gmra.mxu0 %v194
      %v391 = vpop.f32.mrf.mxu0
      %v392 = vadd.f32 0.0, %v391
      %393 = vmatmul.f32.gmra.mxu0 %v195
      %v394 = vpop.f32.mrf.mxu0
      %v395 = vadd.f32 0.0, %v394
      %396 = vmatmul.f32.gmra.mxu0 %v196
      %v397 = vpop.f32.mrf.mxu0
      %v398 = vadd.f32 0.0, %v397
      %399 = vmatmul.f32.gmra.mxu0 %v197
      %v400 = vpop.f32.mrf.mxu0
      %v401 = vadd.f32 0.0, %v400
      %402 = vmatmul.f32.gmra.mxu0 %v198
      %v403 = vpop.f32.mrf.mxu0
      %v404 = vadd.f32 0.0, %v403
      %405 = vmatmul.f32.gmra.mxu0 %v199
      %v406 = vpop.f32.mrf.mxu0
      %v407 = vadd.f32 0.0, %v406
      %408 = vmatmul.f32.gmra.mxu0 %v200
      %v409 = vpop.f32.mrf.mxu0
      %v410 = vadd.f32 0.0, %v409
      %411 = vmatmul.f32.gmra.mxu0 %v201
      %v412 = vpop.f32.mrf.mxu0
      %v413 = vadd.f32 0.0, %v412
      %414 = vmatmul.f32.gmra.mxu0 %v202
      %v415 = vpop.f32.mrf.mxu0
      %v416 = vadd.f32 0.0, %v415
      %417 = vmatmul.f32.gmra.mxu0 %v203
      %v418 = vpop.f32.mrf.mxu0
      %v419 = vadd.f32 0.0, %v418
      %420 = vmatmul.f32.gmra.mxu0 %v204
      %v421 = vpop.f32.mrf.mxu0
      %v422 = vadd.f32 0.0, %v421
      %423 = vmatmul.f32.gmra.mxu0 %v205
      %v424 = vpop.f32.mrf.mxu0
      %v425 = vadd.f32 0.0, %v424
      %426 = vmatmul.f32.gmra.mxu0 %v206
      %v427 = vpop.f32.mrf.mxu0
      %v428 = vadd.f32 0.0, %v427
      %429 = vmatmul.f32.gmra.mxu0 %v207
      %v430 = vpop.f32.mrf.mxu0
      %v431 = vadd.f32 0.0, %v430
      %432 = vdwg.mxu0
      %v433 = vadd.f32 %v242, %v245
      %v434 = vadd.f32 %v433, %v248
      %v435 = vadd.f32 %v434, %v251
      %v436 = vadd.f32 %v435, %v254
      %v437 = vadd.f32 %v436, %v257
      %v438 = vadd.f32 %v437, %v260
      %v439 = vadd.f32 %v438, %v263
      %v440 = vadd.f32 %v439, %v266
      %v441 = vadd.f32 %v440, %v269
      %v442 = vadd.f32 %v441, %v272
      %v443 = vadd.f32 %v442, %v275
      %v444 = vadd.f32 %v443, %v278
      %v445 = vadd.f32 %v444, %v281
      %v446 = vadd.f32 %v445, %v284
      %v447 = vadd.f32 %v446, %v287
      %v448 = vadd.f32 %v447, %v290
      %v449 = vadd.f32 %v448, %v293
      %v450 = vadd.f32 %v449, %v296
      %v451 = vadd.f32 %v450, %v299
      %v452 = vadd.f32 %v451, %v302
      %v453 = vadd.f32 %v452, %v305
      %v454 = vadd.f32 %v453, %v308
      %v455 = vadd.f32 %v454, %v311
      %v456 = vadd.f32 %v455, %v314
      %v457 = vadd.f32 %v456, %v317
      %v458 = vadd.f32 %v457, %v320
      %v459 = vadd.f32 %v458, %v323
      %v460 = vadd.f32 %v459, %v326
      %v461 = vadd.f32 %v460, %v329
      %v462 = vadd.f32 %v461, %v332
      %v463 = vadd.f32 %v462, %v335
      %v464 = vadd.f32 %v463, %v338
      %v465 = vadd.f32 %v464, %v341
      %v466 = vadd.f32 %v465, %v344
      %v467 = vadd.f32 %v466, %v347
      %v468 = vadd.f32 %v467, %v350
      %v469 = vadd.f32 %v468, %v353
      %v470 = vadd.f32 %v469, %v356
      %v471 = vadd.f32 %v470, %v359
      %v472 = vadd.f32 %v471, %v362
      %v473 = vadd.f32 %v472, %v365
      %v474 = vadd.f32 %v473, %v368
      %v475 = vadd.f32 %v474, %v371
      %v476 = vadd.f32 %v475, %v374
      %v477 = vadd.f32 %v476, %v377
      %v478 = vadd.f32 %v477, %v380
      %v479 = vadd.f32 %v478, %v383
      %v480 = vadd.f32 %v479, %v386
      %v481 = vadd.f32 %v480, %v389
      %v482 = vadd.f32 %v481, %v392
      %v483 = vadd.f32 %v482, %v395
      %v484 = vadd.f32 %v483, %v398
      %v485 = vadd.f32 %v484, %v401
      %v486 = vadd.f32 %v485, %v404
      %v487 = vadd.f32 %v486, %v407
      %v488 = vadd.f32 %v487, %v410
      %v489 = vadd.f32 %v488, %v413
      %v490 = vadd.f32 %v489, %v416
      %v491 = vadd.f32 %v490, %v419
      %v492 = vadd.f32 %v491, %v422
      %v493 = vadd.f32 %v492, %v425
      %v494 = vadd.f32 %v493, %v428
      %v495 = vadd.f32 %v494, %v431
      %v496 = vrot.slane %v495, 4
      %v497 = vadd.f32 %v495, %v496
      %v498 = vrot.slane %v497, 2
      %v499 = vadd.f32 %v497, %v498
      %v500 = vrot.slane %v499, 1
      %v501 = vadd.f32 %v499, %v500
      %v502 = vmul.f32 %v242, %v242
      %v503 = vmul.f32 %v245, %v245
      %v504 = vmul.f32 %v248, %v248
      %v505 = vmul.f32 %v251, %v251
      %v506 = vmul.f32 %v254, %v254
      %v507 = vmul.f32 %v257, %v257
      %v508 = vmul.f32 %v260, %v260
      %v509 = vmul.f32 %v263, %v263
      %v510 = vmul.f32 %v266, %v266
      %v511 = vmul.f32 %v269, %v269
      %v512 = vmul.f32 %v272, %v272
      %v513 = vmul.f32 %v275, %v275
      %v514 = vmul.f32 %v278, %v278
      %v515 = vmul.f32 %v281, %v281
      %v516 = vmul.f32 %v284, %v284
      %v517 = vmul.f32 %v287, %v287
      %v518 = vmul.f32 %v290, %v290
      %v519 = vmul.f32 %v293, %v293
      %v520 = vmul.f32 %v296, %v296
      %v521 = vmul.f32 %v299, %v299
      %v522 = vmul.f32 %v302, %v302
      %v523 = vmul.f32 %v305, %v305
      %v524 = vmul.f32 %v308, %v308
      %v525 = vmul.f32 %v311, %v311
      %v526 = vmul.f32 %v314, %v314
      %v527 = vmul.f32 %v317, %v317
      %v528 = vmul.f32 %v320, %v320
      %v529 = vmul.f32 %v323, %v323
      %v530 = vmul.f32 %v326, %v326
      %v531 = vmul.f32 %v329, %v329
      %v532 = vmul.f32 %v332, %v332
      %v533 = vmul.f32 %v335, %v335
      %v534 = vmul.f32 %v338, %v338
      %v535 = vmul.f32 %v341, %v341
      %v536 = vmul.f32 %v344, %v344
      %v537 = vmul.f32 %v347, %v347
      %v538 = vmul.f32 %v350, %v350
      %v539 = vmul.f32 %v353, %v353
      %v540 = vmul.f32 %v356, %v356
      %v541 = vmul.f32 %v359, %v359
      %v542 = vmul.f32 %v362, %v362
      %v543 = vmul.f32 %v365, %v365
      %v544 = vmul.f32 %v368, %v368
      %v545 = vmul.f32 %v371, %v371
      %v546 = vmul.f32 %v374, %v374
      %v547 = vmul.f32 %v377, %v377
      %v548 = vmul.f32 %v380, %v380
      %v549 = vmul.f32 %v383, %v383
      %v550 = vmul.f32 %v386, %v386
      %v551 = vmul.f32 %v389, %v389
      %v552 = vmul.f32 %v392, %v392
      %v553 = vmul.f32 %v395, %v395
      %v554 = vmul.f32 %v398, %v398
      %v555 = vmul.f32 %v401, %v401
      %v556 = vmul.f32 %v404, %v404
      %v557 = vmul.f32 %v407, %v407
      %v558 = vmul.f32 %v410, %v410
      %v559 = vmul.f32 %v413, %v413
      %v560 = vmul.f32 %v416, %v416
      %v561 = vmul.f32 %v419, %v419
      %v562 = vmul.f32 %v422, %v422
      %v563 = vmul.f32 %v425, %v425
      %v564 = vmul.f32 %v428, %v428
      %v565 = vmul.f32 %v431, %v431
      %v566 = vadd.f32 %v502, %v503
      %v567 = vadd.f32 %v566, %v504
      %v568 = vadd.f32 %v567, %v505
      %v569 = vadd.f32 %v568, %v506
      %v570 = vadd.f32 %v569, %v507
      %v571 = vadd.f32 %v570, %v508
      %v572 = vadd.f32 %v571, %v509
      %v573 = vadd.f32 %v572, %v510
      %v574 = vadd.f32 %v573, %v511
      %v575 = vadd.f32 %v574, %v512
      %v576 = vadd.f32 %v575, %v513
      %v577 = vadd.f32 %v576, %v514
      %v578 = vadd.f32 %v577, %v515
      %v579 = vadd.f32 %v578, %v516
      %v580 = vadd.f32 %v579, %v517
      %v581 = vadd.f32 %v580, %v518
      %v582 = vadd.f32 %v581, %v519
      %v583 = vadd.f32 %v582, %v520
      %v584 = vadd.f32 %v583, %v521
      %v585 = vadd.f32 %v584, %v522
      %v586 = vadd.f32 %v585, %v523
      %v587 = vadd.f32 %v586, %v524
      %v588 = vadd.f32 %v587, %v525
      %v589 = vadd.f32 %v588, %v526
      %v590 = vadd.f32 %v589, %v527
      %v591 = vadd.f32 %v590, %v528
      %v592 = vadd.f32 %v591, %v529
      %v593 = vadd.f32 %v592, %v530
      %v594 = vadd.f32 %v593, %v531
      %v595 = vadd.f32 %v594, %v532
      %v596 = vadd.f32 %v595, %v533
      %v597 = vadd.f32 %v596, %v534
      %v598 = vadd.f32 %v597, %v535
      %v599 = vadd.f32 %v598, %v536
      %v600 = vadd.f32 %v599, %v537
      %v601 = vadd.f32 %v600, %v538
      %v602 = vadd.f32 %v601, %v539
      %v603 = vadd.f32 %v602, %v540
      %v604 = vadd.f32 %v603, %v541
      %v605 = vadd.f32 %v604, %v542
      %v606 = vadd.f32 %v605, %v543
      %v607 = vadd.f32 %v606, %v544
      %v608 = vadd.f32 %v607, %v545
      %v609 = vadd.f32 %v608, %v546
      %v610 = vadd.f32 %v609, %v547
      %v611 = vadd.f32 %v610, %v548
      %v612 = vadd.f32 %v611, %v549
      %v613 = vadd.f32 %v612, %v550
      %v614 = vadd.f32 %v613, %v551
      %v615 = vadd.f32 %v614, %v552
      %v616 = vadd.f32 %v615, %v553
      %v617 = vadd.f32 %v616, %v554
      %v618 = vadd.f32 %v617, %v555
      %v619 = vadd.f32 %v618, %v556
      %v620 = vadd.f32 %v619, %v557
      %v621 = vadd.f32 %v620, %v558
      %v622 = vadd.f32 %v621, %v559
      %v623 = vadd.f32 %v622, %v560
      %v624 = vadd.f32 %v623, %v561
      %v625 = vadd.f32 %v624, %v562
      %v626 = vadd.f32 %v625, %v563
      %v627 = vadd.f32 %v626, %v564
      %v628 = vadd.f32 %v627, %v565
      %v629 = vrot.slane %v628, 4
      %v630 = vadd.f32 %v628, %v629
      %v631 = vrot.slane %v630, 2
      %v632 = vadd.f32 %v630, %v631
      %v633 = vrot.slane %v632, 1
      %v634 = vadd.f32 %v632, %v633
      %vm635 = vcmask 1040384
      %v636 = vsel %vm635, %v501, %v634
      %637 = vst [vmem:[%s143] sm:$0x3] %v636
      %p638 = scmp.lt.s32.totalorder %s13, 1
      %s639 = scalar_select %p638, %s13, 1
      %s640 = smul.addr %s639, 2
      %s641 = scalar_lea.vmem %s2, %s640
      // Predicated region
      $region29: #{se_basic_block.3} parent=27 // pred_check
        %p642 = pneg %p78
      $region30: #{se_basic_block.3} parent=27 // pred_check_branch
        %644 = sbr.rel (%p642) target = $region32
      $region31: #{se_basic_block.3} parent=27 // pred_region
        _
      $region32: #{se_basic_block.3} parent=27 // pred_fallthru
        _
    $region28: #{se_basic_block.3} parent=5 // pred_fallthru
      _
    %p645 = scmp.le.s32.totalorder 2, %s8
    // Predicated region
    $region33: #{se_basic_block.3} parent=5 // pred_check
      %p646 = pneg %p645
    $region34: #{se_basic_block.3} parent=5 // pred_check_branch
      %648 = sbr.rel (%p646) target = $region36
    $region35: #{se_basic_block.3} parent=5 // pred_region
      %s649 = ssub.s32 %s8, 2
      // Predicated region
      $region37: #{se_basic_block.3} parent=35 // pred_check
        %p650 = pneg %p84
      $region38: #{se_basic_block.3} parent=35 // pred_check_branch
        %652 = sbr.rel (%p650) target = $region40
      $region39: #{se_basic_block.3} parent=35 // pred_region
        %p653 = scmp.lt.s32.totalorder %s14, 1
        %s654 = scalar_select %p653, %s14, 1
        %s655 = smul.addr %s654, 2
        %s656 = scalar_lea.vmem %s2, %s655
      $region40: #{se_basic_block.3} parent=35 // pred_fallthru
        _
    $region36: #{se_basic_block.3} parent=5 // pred_fallthru
      _
  $region6: #{se_basic_block.3} parent=0 // loop_footer
    %s12 = sadd.s32 1, %s8
  $region7: #{se_basic_block.3} parent=0 // loop_footer_branch
    %7 = sbr.rel target = $region3
  $region8: #{se_basic_block.3} parent=0 // loop_exit
    _

// kernel: se_basic_block.4
$region0: #{se_basic_block.4}
  #allocation0 [shape = 'u32[]', space=smem, size = 0x4, offset = 0x4, fixed_abs, tag = 'smem constant byte address 0x4 - core index']
  #allocation1 [shape = 'u32[72,128]{1,0:T(1,128)}', space=vmem, size = 0x9000, scoped, tag = 'internal scratch']
  #allocation2 [shape = 'f32[2,128]{1,0:T(2,128)}', space=vmem, size = 0x400, scoped, tag = 'scratch operand']
  %s0 = inlined_call_operand.vmem [shape: f32[4,256,128], index: 0, kind: input, shape index: {}]
  %s1 = inlined_call_operand.vmem [shape: f32[2,2,128], index: 1, kind: input, shape index: {}]
  %s2 = inlined_call_operand.vmem [shape: f32[4,128], index: 2, kind: input, shape index: {}]
  %s3 = inlined_call_operand.vmem [shape: f32[128,128], index: 3, kind: input, shape index: {}]
  %s4 = inlined_call_operand.vmem [shape: f32[128,128], index: 4, kind: input, shape index: {}]
  %s5 = inlined_call_operand.vmem [shape: f32[4,256,128], index: 5, kind: output, shape index: {0}]
  %s6 = inlined_call_operand.vmem [shape: f32[4,2,128], index: 6, kind: output, shape index: {1}]
  %s7 = inlined_call_operand.vmem [shape: f32[4,1,128], index: 7, kind: output, shape index: {2}]
  %8 = xla_tuple %s5, %s6, %s7
  %s9 = sld [smem:[#allocation0]]
  $region73: #{se_basic_block.4} parent=0
    _
  %s11 = ssub.s32 1, %s9
  %s12 = scalar_select 0, %s11, %s9
  loop: start=0, step=1, limit=6
  $region2: #{se_basic_block.4} parent=0 // loop_pre_header
    _
  $region3: #{se_basic_block.4} parent=0 // loop_header
    %s14 = sphi 0, %s18
    %p15 = scmp.ge.s32.totalorder %s14, 6
    %s21 = sphi 0, %s33
    %s22 = sphi 0, %s29
    %s23 = sphi 0, %s21
    %s24 = sphi 0, %s22
    %s25 = sphi 0, %s23
    %s26 = sphi 0, %s24
    %s38 = sphi 0, %s40
    %s41 = sphi 0, %s38
    %s42 = sphi 0, %s41
    %s58 = sphi 0, %s42
    %s62 = sphi 0, %s62
    %s64 = sphi 0, %s62
    %s65 = sphi 0, %s64
    %s79 = sphi 0, %s65
    %s83 = sphi 0, %s83
    %s85 = sphi 0, %s83
    %s86 = sphi 0, %s85
    %s100 = sphi 0, %s86
    %s104 = sphi 0, %s104
    %s106 = sphi 0, %s104
    %s107 = sphi 0, %s106
    %s121 = sphi 0, %s107
    %s125 = sphi 0, %s125
    %s127 = sphi 0, %s125
    %s128 = sphi 0, %s127
    %s142 = sphi 0, %s128
    %s150 = sphi 0, %s152
    %s153 = sphi 0, %s150
    %s154 = sphi 0, %s153
    %s170 = sphi 0, %s154
    %s176 = sphi 0, %s178
    %s179 = sphi 0, %s176
    %s180 = sphi 0, %s179
    %s196 = sphi 0, %s180
    %s202 = sphi 0, %s204
    %s205 = sphi 0, %s202
    %s206 = sphi 0, %s205
    %s222 = sphi 0, %s206
  $region4: #{se_basic_block.4} parent=0 // loop_header_branch
    %17 = sbr.rel (%p15) target = $region8
  $region5: #{se_basic_block.4} parent=0 // loop_body
    %s19 = ssub.s32 %s14, 1
    %s20 = ssub.s32 %s14, 2
    %s27 = sadd.s32 1, %s22
    %p28 = scmp.ge.s32.totalorder %s27, 1
    %s29 = scalar_select %p28, 0, %s27
    %s30 = sadd.s32 1, %s21
    %s31 = scalar_select %p28, %s30, %s21
    %p32 = scmp.ge.s32.totalorder %s31, 4
    %s33 = scalar_select %p32, 0, %s31
    %s34 = ssub.s32 %s21, %s33
    %s35 = ssub.s32 %s22, %s29
    %s36 = sor.u32 %s34, %s35
    %p37 = scmp.eq.s32.totalorder %s36, 0
    %s39 = sadd.s32 %s38, 1
    %s40 = scalar_select %p37, %s38, %s39
    %p43 = pneg %p37
    %p44 = scmp.eq.s32.totalorder %s14, 3
    %p45 = por %p43, %p44
    %p46 = scmp.ne.s32.totalorder %s38, %s41
    %p47 = scmp.eq.s32.totalorder %s14, 0
    %p48 = por %p46, %p47
    %p49 = scmp.ne.s32.totalorder %s38, %s41
    %p50 = scmp.eq.s32.totalorder %s19, 3
    %p51 = por %p49, %p50
    %p52 = scmp.ne.s32.totalorder %s41, %s42
    %p53 = scmp.eq.s32.totalorder %s19, 0
    %p54 = por %p52, %p53
    %p55 = scmp.ne.s32.totalorder %s41, %s42
    %p56 = scmp.eq.s32.totalorder %s20, 3
    %p57 = por %p55, %p56
    %p59 = scmp.ne.s32.totalorder %s42, %s58
    %p60 = scmp.eq.s32.totalorder %s20, 0
    %p61 = por %p59, %p60
    %s63 = sadd.s32 %s62, 1
    %p66 = scmp.eq.s32.totalorder %s14, 3
    %p67 = scmp.ne.s32.totalorder %s62, %s64
    %p68 = scmp.eq.s32.totalorder %s14, 0
    %p69 = por %p67, %p68
    %p70 = scmp.ne.s32.totalorder %s62, %s64
    %p71 = scmp.eq.s32.totalorder %s19, 3
    %p72 = por %p70, %p71
    %p73 = scmp.ne.s32.totalorder %s64, %s65
    %p74 = scmp.eq.s32.totalorder %s19, 0
    %p75 = por %p73, %p74
    %p76 = scmp.ne.s32.totalorder %s64, %s65
    %p77 = scmp.eq.s32.totalorder %s20, 3
    %p78 = por %p76, %p77
    %p80 = scmp.ne.s32.totalorder %s65, %s79
    %p81 = scmp.eq.s32.totalorder %s20, 0
    %p82 = por %p80, %p81
    %s84 = sadd.s32 %s83, 1
    %p87 = scmp.eq.s32.totalorder %s14, 3
    %p88 = scmp.ne.s32.totalorder %s83, %s85
    %p89 = scmp.eq.s32.totalorder %s14, 0
    %p90 = por %p88, %p89
    %p91 = scmp.ne.s32.totalorder %s83, %s85
    %p92 = scmp.eq.s32.totalorder %s19, 3
    %p93 = por %p91, %p92
    %p94 = scmp.ne.s32.totalorder %s85, %s86
    %p95 = scmp.eq.s32.totalorder %s19, 0
    %p96 = por %p94, %p95
    %p97 = scmp.ne.s32.totalorder %s85, %s86
    %p98 = scmp.eq.s32.totalorder %s20, 3
    %p99 = por %p97, %p98
    %p101 = scmp.ne.s32.totalorder %s86, %s100
    %p102 = scmp.eq.s32.totalorder %s20, 0
    %p103 = por %p101, %p102
    %s105 = sadd.s32 %s104, 1
    %p108 = scmp.eq.s32.totalorder %s14, 3
    %p109 = scmp.ne.s32.totalorder %s104, %s106
    %p110 = scmp.eq.s32.totalorder %s14, 0
    %p111 = por %p109, %p110
    %p112 = scmp.ne.s32.totalorder %s104, %s106
    %p113 = scmp.eq.s32.totalorder %s19, 3
    %p114 = por %p112, %p113
    %p115 = scmp.ne.s32.totalorder %s106, %s107
    %p116 = scmp.eq.s32.totalorder %s19, 0
    %p117 = por %p115, %p116
    %p118 = scmp.ne.s32.totalorder %s106, %s107
    %p119 = scmp.eq.s32.totalorder %s20, 3
    %p120 = por %p118, %p119
    %p122 = scmp.ne.s32.totalorder %s107, %s121
    %p123 = scmp.eq.s32.totalorder %s20, 0
    %p124 = por %p122, %p123
    %s126 = sadd.s32 %s125, 1
    %p129 = scmp.eq.s32.totalorder %s14, 3
    %p130 = scmp.ne.s32.totalorder %s125, %s127
    %p131 = scmp.eq.s32.totalorder %s14, 0
    %p132 = por %p130, %p131
    %p133 = scmp.ne.s32.totalorder %s125, %s127
    %p134 = scmp.eq.s32.totalorder %s19, 3
    %p135 = por %p133, %p134
    %p136 = scmp.ne.s32.totalorder %s127, %s128
    %p137 = scmp.eq.s32.totalorder %s19, 0
    %p138 = por %p136, %p137
    %p139 = scmp.ne.s32.totalorder %s127, %s128
    %p140 = scmp.eq.s32.totalorder %s20, 3
    %p141 = por %p139, %p140
    %p143 = scmp.ne.s32.totalorder %s128, %s142
    %p144 = scmp.eq.s32.totalorder %s20, 0
    %p145 = por %p143, %p144
    %s146 = ssub.s32 %s21, %s33
    %s147 = ssub.s32 %s22, %s29
    %s148 = sor.u32 %s146, %s147
    %p149 = scmp.eq.s32.totalorder %s148, 0
    %s151 = sadd.s32 %s150, 1
    %s152 = scalar_select %p149, %s150, %s151
    %p155 = pneg %p149
    %p156 = scmp.eq.s32.totalorder %s14, 3
    %p157 = por %p155, %p156
    %p158 = scmp.ne.s32.totalorder %s150, %s153
    %p159 = scmp.eq.s32.totalorder %s14, 0
    %p160 = por %p158, %p159
    %p161 = scmp.ne.s32.totalorder %s150, %s153
    %p162 = scmp.eq.s32.totalorder %s19, 3
    %p163 = por %p161, %p162
    %p164 = scmp.ne.s32.totalorder %s153, %s154
    %p165 = scmp.eq.s32.totalorder %s19, 0
    %p166 = por %p164, %p165
    %p167 = scmp.ne.s32.totalorder %s153, %s154
    %p168 = scmp.eq.s32.totalorder %s20, 3
    %p169 = por %p167, %p168
    %p171 = scmp.ne.s32.totalorder %s154, %s170
    %p172 = scmp.eq.s32.totalorder %s20, 0
    %p173 = por %p171, %p172
    %s174 = ssub.s32 %s21, %s33
    %p175 = scmp.eq.s32.totalorder %s174, 0
    %s177 = sadd.s32 %s176, 1
    %s178 = scalar_select %p175, %s176, %s177
    %p181 = pneg %p175
    %p182 = scmp.eq.s32.totalorder %s14, 3
    %p183 = por %p181, %p182
    %p184 = scmp.ne.s32.totalorder %s176, %s179
    %p185 = scmp.eq.s32.totalorder %s14, 0
    %p186 = por %p184, %p185
    %p187 = scmp.ne.s32.totalorder %s176, %s179
    %p188 = scmp.eq.s32.totalorder %s19, 3
    %p189 = por %p187, %p188
    %p190 = scmp.ne.s32.totalorder %s179, %s180
    %p191 = scmp.eq.s32.totalorder %s19, 0
    %p192 = por %p190, %p191
    %p193 = scmp.ne.s32.totalorder %s179, %s180
    %p194 = scmp.eq.s32.totalorder %s20, 3
    %p195 = por %p193, %p194
    %p197 = scmp.ne.s32.totalorder %s180, %s196
    %p198 = scmp.eq.s32.totalorder %s20, 0
    %p199 = por %p197, %p198
    %s200 = ssub.s32 %s21, %s33
    %p201 = scmp.eq.s32.totalorder %s200, 0
    %s203 = sadd.s32 %s202, 1
    %s204 = scalar_select %p201, %s202, %s203
    %p207 = pneg %p201
    %p208 = scmp.eq.s32.totalorder %s14, 3
    %p209 = por %p207, %p208
    %p210 = scmp.ne.s32.totalorder %s202, %s205
    %p211 = scmp.eq.s32.totalorder %s14, 0
    %p212 = por %p210, %p211
    %p213 = scmp.ne.s32.totalorder %s202, %s205
    %p214 = scmp.eq.s32.totalorder %s19, 3
    %p215 = por %p213, %p214
    %p216 = scmp.ne.s32.totalorder %s205, %s206
    %p217 = scmp.eq.s32.totalorder %s19, 0
    %p218 = por %p216, %p217
    %p219 = scmp.ne.s32.totalorder %s205, %s206
    %p220 = scmp.eq.s32.totalorder %s20, 3
    %p221 = por %p219, %p220
    %p223 = scmp.ne.s32.totalorder %s206, %s222
    %p224 = scmp.eq.s32.totalorder %s20, 0
    %p225 = por %p223, %p224
    %p226 = scmp.le.s32.totalorder 1, %s14
    %p227 = scmp.lt.s32.totalorder %s14, 5
    %p228 = pnand %p226, %p227
    %p229 = pneg %p228
    // Predicated region
    $region9: #{se_basic_block.4} parent=5 // pred_check
      _
    $region10: #{se_basic_block.4} parent=5 // pred_check_branch
      %231 = sbr.rel (%p228) target = $region12
    $region11: #{se_basic_block.4} parent=5 // pred_region
      %s232 = ssub.s32 %s14, 1
      // Predicated region
      $region13: #{se_basic_block.4} parent=11 // pred_check
        %p233 = pneg %p75
      $region14: #{se_basic_block.4} parent=11 // pred_check_branch
        %235 = sbr.rel (%p233) target = $region16
      $region15: #{se_basic_block.4} parent=11 // pred_region
        _
      $region16: #{se_basic_block.4} parent=11 // pred_fallthru
        _
      // Predicated region
      $region17: #{se_basic_block.4} parent=11 // pred_check
        %p236 = pneg %p96
      $region18: #{se_basic_block.4} parent=11 // pred_check_branch
        %238 = sbr.rel (%p236) target = $region20
      $region19: #{se_basic_block.4} parent=11 // pred_region
        _
      $region20: #{se_basic_block.4} parent=11 // pred_fallthru
        _
      // Predicated region
      $region21: #{se_basic_block.4} parent=11 // pred_check
        %p239 = pneg %p117
      $region22: #{se_basic_block.4} parent=11 // pred_check_branch
        %241 = sbr.rel (%p239) target = $region24
      $region23: #{se_basic_block.4} parent=11 // pred_region
        _
      $region24: #{se_basic_block.4} parent=11 // pred_fallthru
        _
      // Predicated region
      $region25: #{se_basic_block.4} parent=11 // pred_check
        %p242 = pneg %p138
      $region26: #{se_basic_block.4} parent=11 // pred_check_branch
        %244 = sbr.rel (%p242) target = $region28
      $region27: #{se_basic_block.4} parent=11 // pred_region
        _
      $region28: #{se_basic_block.4} parent=11 // pred_fallthru
        _
    $region12: #{se_basic_block.4} parent=5 // pred_fallthru
      _
    %p245 = scmp.lt.s32.totalorder %s14, 4
    // Predicated region
    $region29: #{se_basic_block.4} parent=5 // pred_check
      %p246 = pneg %p245
    $region30: #{se_basic_block.4} parent=5 // pred_check_branch
      %248 = sbr.rel (%p246) target = $region32
    $region31: #{se_basic_block.4} parent=5 // pred_region
      // Predicated region
      $region33: #{se_basic_block.4} parent=31 // pred_check
        %p249 = pneg %p48
      $region34: #{se_basic_block.4} parent=31 // pred_check_branch
        %251 = sbr.rel (%p249) target = $region36
      $region35: #{se_basic_block.4} parent=31 // pred_region
        %s252 = smul.u32 32, %s22
        %p253 = scmp.lt.s32.totalorder %s21, 3
        %s254 = scalar_select %p253, %s21, 3
        %p255 = scmp.lt.s32.totalorder %s252, 31
        %s256 = scalar_select %p255, %s252, 31
        %s257 = smul.addr %s254, 32
        %s258 = sadd.s32 %s256, %s257
        %s259 = smul.addr %s258, 8
        %s260 = scalar_lea.vmem %s0, %s259
        %s261 = smul.u32 32, %s22
      $region36: #{se_basic_block.4} parent=31 // pred_fallthru
        _
    $region32: #{se_basic_block.4} parent=5 // pred_fallthru
      _
    %p262 = scmp.le.s32.totalorder 1, %s14
    %p263 = scmp.lt.s32.totalorder %s14, 5
    %p264 = pnand %p262, %p263
    %p265 = pneg %p264
    // Predicated region
    $region37: #{se_basic_block.4} parent=5 // pred_check
      _
    $region38: #{se_basic_block.4} parent=5 // pred_check_branch
      %267 = sbr.rel (%p264) target = $region40
    $region39: #{se_basic_block.4} parent=5 // pred_region
      %s268 = ssub.s32 %s14, 1
      %s269 = smul.u32 32, %s24
      %p270 = scmp.lt.s32.totalorder %s23, 3
      %s271 = scalar_select %p270, %s23, 3
      %p272 = scmp.lt.s32.totalorder %s269, 31
      %s273 = scalar_select %p272, %s269, 31
      %s274 = smul.addr %s271, 32
      %s275 = sadd.s32 %s273, %s274
      %s276 = smul.addr %s275, 8
      %s277 = scalar_lea.vmem %s0, %s276
      %p278 = pneg %p54
      %p279 = pneg %p51
      %p280 = pneg %p75
      %p281 = pneg %p72
      %p282 = pneg %p96
      %p283 = pneg %p93
      %p284 = pneg %p117
      %p285 = pneg %p114
      %p286 = pneg %p138
      %p287 = pneg %p135
      %p288 = pneg %p166
      %p289 = pneg %p163
      %s290 = smul.u32 32, %s24
      %p291 = scmp.lt.s32.totalorder %s23, 3
      %s292 = scalar_select %p291, %s23, 3
      %p293 = scmp.lt.s32.totalorder %s290, 31
      %s294 = scalar_select %p293, %s290, 31
      %s295 = smul.addr %s292, 32
      %s296 = sadd.s32 %s294, %s295
      %s297 = smul.addr %s296, 8
      %s298 = scalar_lea.vmem %s5, %s297
      %p299 = pneg %p192
      %p300 = pneg %p189
      %p301 = scmp.lt.s32.totalorder %s23, 3
      %s302 = scalar_select %p301, %s23, 3
      %s303 = smul.addr %s302, 2
      %s304 = scalar_lea.vmem %s6, %s303
      %p305 = pneg %p218
      %p306 = pneg %p215
      %p307 = scmp.lt.s32.totalorder %s23, 3
      %s308 = scalar_select %p307, %s23, 3
      %s309 = scalar_lea.vmem %s7, %s308
      %s310 = smul.u32 32, %s24
      %p311 = scmp.lt.s32.totalorder %s23, 3
      %s312 = scalar_select %p311, %s23, 3
      %p313 = scmp.lt.s32.totalorder %s310, 31
      %s314 = scalar_select %p313, %s310, 31
      %s315 = smul.addr %s312, 32
      %s316 = sadd.s32 %s314, %s315
      %s317 = smul.addr %s316, 8
      %s318 = scalar_lea.vmem %s0, %s317
      %s319 = smul.u32 32, %s24
      %s320 = smul.u32 32, %s24
      %p321 = scmp.lt.s32.totalorder %s23, 3
      %s322 = scalar_select %p321, %s23, 3
      %p323 = scmp.lt.s32.totalorder %s320, 31
      %s324 = scalar_select %p323, %s320, 31
      %s325 = smul.addr %s322, 32
      %s326 = sadd.s32 %s324, %s325
      %s327 = smul.addr %s326, 8
      %s328 = scalar_lea.vmem %s5, %s327
      %s329 = smul.u32 32, %s24
      %p330 = scmp.lt.s32.totalorder %s23, 3
      %s331 = scalar_select %p330, %s23, 3
      %s332 = smul.addr %s331, 2
      %s333 = scalar_lea.vmem %s6, %s332
      %p334 = scmp.lt.s32.totalorder %s23, 3
      %s335 = scalar_select %p334, %s23, 3
      %s336 = scalar_lea.vmem %s7, %s335
      %p337 = scmp.eq.s32.totalorder %s24, 0
      // Predicated region
      $region41: #{se_basic_block.4} parent=39 // pred_check
        %p338 = pneg %p337
      $region42: #{se_basic_block.4} parent=39 // pred_check_branch
        %340 = sbr.rel (%p338) target = $region44
      $region43: #{se_basic_block.4} parent=39 // pred_region
        %v341 = vld [vmem:[%s1] sm:$0x3]
        %v342 = vld [vmem:[%s1 + $0x2] sm:$0x3]
        %vm343 = vcmask 1041408
        %v344 = vsel %vm343, %v341, 0.0
        %v345 = vsel %vm343, %v342, 0.0
        %v346 = vadd.f32 %v344, %v345
        %v347 = vmul.f32 %v346, 0.0009765625
        %v348 = vmul.f32 %v347, %v347
        %v350 = vrot.slane %v348, 7
        %v352 = vsub.f32 %v347, %v350
        %v353 = vadd.f32 %v352, 1e-05
        %v354 = vrsqrt.pop %v353
        %v355 = vmul.f32 %v354, %v353
        %v356 = vmul.f32 %v355, %v354
        %v357 = vmul.f32 0.5, %v356
        %v358 = vsub.f32 1.5, %v357
        %v359 = vmul.f32 %v354, %v358
        %vm360 = vweird.f32 %v353
        %vm361 = vweird.f32 %v354
        %vm362 = vmor %vm360, %vm361
        %v363 = vsel %vm362, %v354, %v359
        %v364 = vld [vmem:[%s2] sm:$0x1]
        %v366 = vrot.slane %v364, 7
        %v368 = vmul.f32 %v363, %v366
        %v369 = vld [vmem:[%s2 + $0x1] sm:$0x1]
        %v371 = vrot.slane %v368, 1
        %v373 = vmul.f32 %v347, %v371
        %v374 = vsub.f32 %v369, %v373
        %v376 = vrot.slane %v374, 7
        %vm378 = vcmask 1040384
        %v379 = vsel %vm378, %v371, %v376
        %380 = vst [vmem:[#allocation2] sm:$0x3] %v379
        %381 = vst [vmem:[%s333] sm:$0x3] 0.0
        %382 = vst [vmem:[%s336] sm:$0x1] 0.0
      $region44: #{se_basic_block.4} parent=39 // pred_fallthru
        _
      %v383 = vld [vmem:[%s318] sm:$0xff]
      %v384 = vld [vmem:[%s318 + $0x8] sm:$0xff]
      %v385 = vld [vmem:[%s318 + $0x10] sm:$0xff]
      %v386 = vld [vmem:[%s318 + $0x18] sm:$0xff]
      %v387 = vld [vmem:[%s318 + $0x20] sm:$0xff]
      %v388 = vld [vmem:[%s318 + $0x28] sm:$0xff]
      %v389 = vld [vmem:[%s318 + $0x30] sm:$0xff]
      %v390 = vld [vmem:[%s318 + $0x38] sm:$0xff]
      %v391 = vld [vmem:[%s318 + $0x40] sm:$0xff]
      %v392 = vld [vmem:[%s318 + $0x48] sm:$0xff]
      %v393 = vld [vmem:[%s318 + $0x50] sm:$0xff]
      %v394 = vld [vmem:[%s318 + $0x58] sm:$0xff]
      %v395 = vld [vmem:[%s318 + $0x60] sm:$0xff]
      %v396 = vld [vmem:[%s318 + $0x68] sm:$0xff]
      %v397 = vld [vmem:[%s318 + $0x70] sm:$0xff]
      %v398 = vld [vmem:[%s318 + $0x78] sm:$0xff]
      %v399 = vld [vmem:[%s318 + $0x80] sm:$0xff]
      %v400 = vld [vmem:[%s318 + $0x88] sm:$0xff]
      %v401 = vld [vmem:[%s318 + $0x90] sm:$0xff]
      %v402 = vld [vmem:[%s318 + $0x98] sm:$0xff]
      %v403 = vld [vmem:[%s318 + $0xa0] sm:$0xff]
      %v404 = vld [vmem:[%s318 + $0xa8] sm:$0xff]
      %v405 = vld [vmem:[%s318 + $0xb0] sm:$0xff]
      %v406 = vld [vmem:[%s318 + $0xb8] sm:$0xff]
      %v407 = vld [vmem:[%s318 + $0xc0] sm:$0xff]
      %v408 = vld [vmem:[%s318 + $0xc8] sm:$0xff]
      %v409 = vld [vmem:[%s318 + $0xd0] sm:$0xff]
      %v410 = vld [vmem:[%s318 + $0xd8] sm:$0xff]
      %v411 = vld [vmem:[%s318 + $0xe0] sm:$0xff]
      %v412 = vld [vmem:[%s318 + $0xe8] sm:$0xff]
      %v413 = vld [vmem:[%s318 + $0xf0] sm:$0xff]
      %v414 = vld [vmem:[%s318 + $0xf8] sm:$0xff]
      %v415 = vld [vmem:[%s3] sm:$0xff]
      %v416 = vld [vmem:[%s3 + $0x8] sm:$0xff]
      %v417 = vld [vmem:[%s3 + $0x10] sm:$0xff]
      %v418 = vld [vmem:[%s3 + $0x18] sm:$0xff]
      %v419 = vld [vmem:[%s3 + $0x20] sm:$0xff]
      %v420 = vld [vmem:[%s3 + $0x28] sm:$0xff]
      %v421 = vld [vmem:[%s3 + $0x30] sm:$0xff]
      %v422 = vld [vmem:[%s3 + $0x38] sm:$0xff]
      %v423 = vld [vmem:[%s3 + $0x40] sm:$0xff]
      %v424 = vld [vmem:[%s3 + $0x48] sm:$0xff]
      %v425 = vld [vmem:[%s3 + $0x50] sm:$0xff]
      %v426 = vld [vmem:[%s3 + $0x58] sm:$0xff]
      %v427 = vld [vmem:[%s3 + $0x60] sm:$0xff]
      %v428 = vld [vmem:[%s3 + $0x68] sm:$0xff]
      %v429 = vld [vmem:[%s3 + $0x70] sm:$0xff]
      %v430 = vld [vmem:[%s3 + $0x78] sm:$0xff]
      %431 = vmatpush.msra.mxu0 %v430
      %432 = vmatpush.msra.mxu0 %v429
      %433 = vmatpush.msra.mxu0 %v428
      %434 = vmatpush.msra.mxu0 %v427
      %435 = vmatpush.msra.mxu0 %v426
      %436 = vmatpush.msra.mxu0 %v425
      %437 = vmatpush.msra.mxu0 %v424
      %438 = vmatpush.msra.mxu0 %v423
      %439 = vmatpush.msra.mxu0 %v422
      %440 = vmatpush.msra.mxu0 %v421
      %441 = vmatpush.msra.mxu0 %v420
      %442 = vmatpush.msra.mxu0 %v419
      %443 = vmatpush.msra.mxu0 %v418
      %444 = vmatpush.msra.mxu0 %v417
      %445 = vmatpush.msra.mxu0 %v416
      %446 = vmatpush.msra.mxu0 %v415
      %447 = vmatmul.f32.gmra.mxu0 %v383
      %v448 = vpop.f32.mrf.mxu0
      %v449 = vadd.f32 0.0, %v448
      %450 = vmatmul.f32.gmra.mxu0 %v384
      %v451 = vpop.f32.mrf.mxu0
      %v452 = vadd.f32 0.0, %v451
      %453 = vmatmul.f32.gmra.mxu0 %v385
      %v454 = vpop.f32.mrf.mxu0
      %v455 = vadd.f32 0.0, %v454
      %456 = vmatmul.f32.gmra.mxu0 %v386
      %v457 = vpop.f32.mrf.mxu0
      %v458 = vadd.f32 0.0, %v457
      %459 = vmatmul.f32.gmra.mxu0 %v387
      %v460 = vpop.f32.mrf.mxu0
      %v461 = vadd.f32 0.0, %v460
      %462 = vmatmul.f32.gmra.mxu0 %v388
      %v463 = vpop.f32.mrf.mxu0
      %v464 = vadd.f32 0.0, %v463
      %465 = vmatmul.f32.gmra.mxu0 %v389
      %v466 = vpop.f32.mrf.mxu0
      %v467 = vadd.f32 0.0, %v466
      %468 = vmatmul.f32.gmra.mxu0 %v390
      %v469 = vpop.f32.mrf.mxu0
      %v470 = vadd.f32 0.0, %v469
      %471 = vmatmul.f32.gmra.mxu0 %v391
      %v472 = vpop.f32.mrf.mxu0
      %v473 = vadd.f32 0.0, %v472
      %474 = vmatmul.f32.gmra.mxu0 %v392
      %v475 = vpop.f32.mrf.mxu0
      %v476 = vadd.f32 0.0, %v475
      %477 = vmatmul.f32.gmra.mxu0 %v393
      %v478 = vpop.f32.mrf.mxu0
      %v479 = vadd.f32 0.0, %v478
      %480 = vmatmul.f32.gmra.mxu0 %v394
      %v481 = vpop.f32.mrf.mxu0
      %v482 = vadd.f32 0.0, %v481
      %483 = vmatmul.f32.gmra.mxu0 %v395
      %v484 = vpop.f32.mrf.mxu0
      %v485 = vadd.f32 0.0, %v484
      %486 = vmatmul.f32.gmra.mxu0 %v396
      %v487 = vpop.f32.mrf.mxu0
      %v488 = vadd.f32 0.0, %v487
      %489 = vmatmul.f32.gmra.mxu0 %v397
      %v490 = vpop.f32.mrf.mxu0
      %v491 = vadd.f32 0.0, %v490
      %492 = vmatmul.f32.gmra.mxu0 %v398
      %v493 = vpop.f32.mrf.mxu0
      %v494 = vadd.f32 0.0, %v493
      %495 = vmatmul.f32.gmra.mxu0 %v399
      %v496 = vpop.f32.mrf.mxu0
      %v497 = vadd.f32 0.0, %v496
      %498 = vmatmul.f32.gmra.mxu0 %v400
      %v499 = vpop.f32.mrf.mxu0
      %v500 = vadd.f32 0.0, %v499
      %501 = vmatmul.f32.gmra.mxu0 %v401
      %v502 = vpop.f32.mrf.mxu0
      %v503 = vadd.f32 0.0, %v502
      %504 = vmatmul.f32.gmra.mxu0 %v402
      %v505 = vpop.f32.mrf.mxu0
      %v506 = vadd.f32 0.0, %v505
      %507 = vmatmul.f32.gmra.mxu0 %v403
      %v508 = vpop.f32.mrf.mxu0
      %v509 = vadd.f32 0.0, %v508
      %510 = vmatmul.f32.gmra.mxu0 %v404
      %v511 = vpop.f32.mrf.mxu0
      %v512 = vadd.f32 0.0, %v511
      %513 = vmatmul.f32.gmra.mxu0 %v405
      %v514 = vpop.f32.mrf.mxu0
      %v515 = vadd.f32 0.0, %v514
      %516 = vmatmul.f32.gmra.mxu0 %v406
      %v517 = vpop.f32.mrf.mxu0
      %v518 = vadd.f32 0.0, %v517
      %519 = vmatmul.f32.gmra.mxu0 %v407
      %v520 = vpop.f32.mrf.mxu0
      %v521 = vadd.f32 0.0, %v520
      %522 = vmatmul.f32.gmra.mxu0 %v408
      %v523 = vpop.f32.mrf.mxu0
      %v524 = vadd.f32 0.0, %v523
      %525 = vmatmul.f32.gmra.mxu0 %v409
      %v526 = vpop.f32.mrf.mxu0
      %v527 = vadd.f32 0.0, %v526
      %528 = vmatmul.f32.gmra.mxu0 %v410
      %v529 = vpop.f32.mrf.mxu0
      %v530 = vadd.f32 0.0, %v529
      %531 = vmatmul.f32.gmra.mxu0 %v411
      %v532 = vpop.f32.mrf.mxu0
      %v533 = vadd.f32 0.0, %v532
      %534 = vmatmul.f32.gmra.mxu0 %v412
      %v535 = vpop.f32.mrf.mxu0
      %v536 = vadd.f32 0.0, %v535
      %537 = vmatmul.f32.gmra.mxu0 %v413
      %v538 = vpop.f32.mrf.mxu0
      %v539 = vadd.f32 0.0, %v538
      %540 = vmatmul.f32.gmra.mxu0 %v414
      %v541 = vpop.f32.mrf.mxu0
      %v542 = vadd.f32 0.0, %v541
      %543 = vdwg.mxu0
      %v544 = vld [vmem:[#allocation2] sm:$0x1]
      %v545 = vperm.slane %v544, 0
      %v546 = vmul.f32 %v449, %v545
      %v547 = vmul.f32 %v452, %v545
      %v548 = vmul.f32 %v455, %v545
      %v549 = vmul.f32 %v458, %v545
      %v550 = vmul.f32 %v461, %v545
      %v551 = vmul.f32 %v464, %v545
      %v552 = vmul.f32 %v467, %v545
      %v553 = vmul.f32 %v470, %v545
      %v554 = vmul.f32 %v473, %v545
      %v555 = vmul.f32 %v476, %v545
      %v556 = vmul.f32 %v479, %v545
      %v557 = vmul.f32 %v482, %v545
      %v558 = vmul.f32 %v485, %v545
      %v559 = vmul.f32 %v488, %v545
      %v560 = vmul.f32 %v491, %v545
      %v561 = vmul.f32 %v494, %v545
      %v562 = vmul.f32 %v497, %v545
      %v563 = vmul.f32 %v500, %v545
      %v564 = vmul.f32 %v503, %v545
      %v565 = vmul.f32 %v506, %v545
      %v566 = vmul.f32 %v509, %v545
      %v567 = vmul.f32 %v512, %v545
      %v568 = vmul.f32 %v515, %v545
      %v569 = vmul.f32 %v518, %v545
      %v570 = vmul.f32 %v521, %v545
      %v571 = vmul.f32 %v524, %v545
      %v572 = vmul.f32 %v527, %v545
      %v573 = vmul.f32 %v530, %v545
      %v574 = vmul.f32 %v533, %v545
      %v575 = vmul.f32 %v536, %v545
      %v576 = vmul.f32 %v539, %v545
      %v577 = vmul.f32 %v542, %v545
      %v578 = vld [vmem:[#allocation2 + $0x1] sm:$0x1]
      %v579 = vperm.slane %v578, 0
      %v580 = vadd.f32 %v546, %v579
      %v581 = vadd.f32 %v547, %v579
      %v582 = vadd.f32 %v548, %v579
      %v583 = vadd.f32 %v549, %v579
      %v584 = vadd.f32 %v550, %v579
      %v585 = vadd.f32 %v551, %v579
      %v586 = vadd.f32 %v552, %v579
      %v587 = vadd.f32 %v553, %v579
      %v588 = vadd.f32 %v554, %v579
      %v589 = vadd.f32 %v555, %v579
      %v590 = vadd.f32 %v556, %v579
      %v591 = vadd.f32 %v557, %v579
      %v592 = vadd.f32 %v558, %v579
      %v593 = vadd.f32 %v559, %v579
      %v594 = vadd.f32 %v560, %v579
      %v595 = vadd.f32 %v561, %v579
      %v596 = vadd.f32 %v562, %v579
      %v597 = vadd.f32 %v563, %v579
      %v598 = vadd.f32 %v564, %v579
      %v599 = vadd.f32 %v565, %v579
      %v600 = vadd.f32 %v566, %v579
      %v601 = vadd.f32 %v567, %v579
      %v602 = vadd.f32 %v568, %v579
      %v603 = vadd.f32 %v569, %v579
      %v604 = vadd.f32 %v570, %v579
      %v605 = vadd.f32 %v571, %v579
      %v606 = vadd.f32 %v572, %v579
      %v607 = vadd.f32 %v573, %v579
      %v608 = vadd.f32 %v574, %v579
      %v609 = vadd.f32 %v575, %v579
      %v610 = vadd.f32 %v576, %v579
      %v611 = vadd.f32 %v577, %v579
      %v612 = vmax.f32 %v580, 0.0
      %v613 = vmax.f32 %v581, 0.0
      %v614 = vmax.f32 %v582, 0.0
      %v615 = vmax.f32 %v583, 0.0
      %v616 = vmax.f32 %v584, 0.0
      %v617 = vmax.f32 %v585, 0.0
      %v618 = vmax.f32 %v586, 0.0
      %v619 = vmax.f32 %v587, 0.0
      %v620 = vmax.f32 %v588, 0.0
      %v621 = vmax.f32 %v589, 0.0
      %v622 = vmax.f32 %v590, 0.0
      %v623 = vmax.f32 %v591, 0.0
      %v624 = vmax.f32 %v592, 0.0
      %v625 = vmax.f32 %v593, 0.0
      %v626 = vmax.f32 %v594, 0.0
      %v627 = vmax.f32 %v595, 0.0
      %v628 = vmax.f32 %v596, 0.0
      %v629 = vmax.f32 %v597, 0.0
      %v630 = vmax.f32 %v598, 0.0
      %v631 = vmax.f32 %v599, 0.0
      %v632 = vmax.f32 %v600, 0.0
      %v633 = vmax.f32 %v601, 0.0
      %v634 = vmax.f32 %v602, 0.0
      %v635 = vmax.f32 %v603, 0.0
      %v636 = vmax.f32 %v604, 0.0
      %v637 = vmax.f32 %v605, 0.0
      %v638 = vmax.f32 %v606, 0.0
      %v639 = vmax.f32 %v607, 0.0
      %v640 = vmax.f32 %v608, 0.0
      %v641 = vmax.f32 %v609, 0.0
      %v642 = vmax.f32 %v610, 0.0
      %v643 = vmax.f32 %v611, 0.0
      %v644 = vld [vmem:[%s4] sm:$0xff]
      %v645 = vld [vmem:[%s4 + $0x8] sm:$0xff]
      %v646 = vld [vmem:[%s4 + $0x10] sm:$0xff]
      %v647 = vld [vmem:[%s4 + $0x18] sm:$0xff]
      %v648 = vld [vmem:[%s4 + $0x20] sm:$0xff]
      %v649 = vld [vmem:[%s4 + $0x28] sm:$0xff]
      %v650 = vld [vmem:[%s4 + $0x30] sm:$0xff]
      %v651 = vld [vmem:[%s4 + $0x38] sm:$0xff]
      %v652 = vld [vmem:[%s4 + $0x40] sm:$0xff]
      %v653 = vld [vmem:[%s4 + $0x48] sm:$0xff]
      %v654 = vld [vmem:[%s4 + $0x50] sm:$0xff]
      %v655 = vld [vmem:[%s4 + $0x58] sm:$0xff]
      %v656 = vld [vmem:[%s4 + $0x60] sm:$0xff]
      %v657 = vld [vmem:[%s4 + $0x68] sm:$0xff]
      %v658 = vld [vmem:[%s4 + $0x70] sm:$0xff]
      %v659 = vld [vmem:[%s4 + $0x78] sm:$0xff]
      %660 = vmatpush.msra.mxu0 %v659
      %661 = vmatpush.msra.mxu0 %v658
      %662 = vmatpush.msra.mxu0 %v657
      %663 = vmatpush.msra.mxu0 %v656
      %664 = vmatpush.msra.mxu0 %v655
      %665 = vmatpush.msra.mxu0 %v654
      %666 = vmatpush.msra.mxu0 %v653
      %667 = vmatpush.msra.mxu0 %v652
      %668 = vmatpush.msra.mxu0 %v651
      %669 = vmatpush.msra.mxu0 %v650
      %670 = vmatpush.msra.mxu0 %v649
      %671 = vmatpush.msra.mxu0 %v648
      %672 = vmatpush.msra.mxu0 %v647
      %673 = vmatpush.msra.mxu0 %v646
      %674 = vmatpush.msra.mxu0 %v645
      %675 = vmatpush.msra.mxu0 %v644
      %676 = vmatmul.f32.gmra.mxu0 %v612
      %v677 = vpop.f32.mrf.mxu0
      %v678 = vadd.f32 0.0, %v677
      %679 = vmatmul.f32.gmra.mxu0 %v613
      %v680 = vpop.f32.mrf.mxu0
      %v681 = vadd.f32 0.0, %v680
      %682 = vmatmul.f32.gmra.mxu0 %v614
      %v683 = vpop.f32.mrf.mxu0
      %v684 = vadd.f32 0.0, %v683
      %685 = vmatmul.f32.gmra.mxu0 %v615
      %v686 = vpop.f32.mrf.mxu0
      %v687 = vadd.f32 0.0, %v686
      %688 = vmatmul.f32.gmra.mxu0 %v616
      %v689 = vpop.f32.mrf.mxu0
      %v690 = vadd.f32 0.0, %v689
      %691 = vmatmul.f32.gmra.mxu0 %v617
      %v692 = vpop.f32.mrf.mxu0
      %v693 = vadd.f32 0.0, %v692
      %694 = vmatmul.f32.gmra.mxu0 %v618
      %v695 = vpop.f32.mrf.mxu0
      %v696 = vadd.f32 0.0, %v695
      %697 = vmatmul.f32.gmra.mxu0 %v619
      %v698 = vpop.f32.mrf.mxu0
      %v699 = vadd.f32 0.0, %v698
      %700 = vmatmul.f32.gmra.mxu0 %v620
      %v701 = vpop.f32.mrf.mxu0
      %v702 = vadd.f32 0.0, %v701
      %703 = vmatmul.f32.gmra.mxu0 %v621
      %v704 = vpop.f32.mrf.mxu0
      %v705 = vadd.f32 0.0, %v704
      %706 = vmatmul.f32.gmra.mxu0 %v622
      %v707 = vpop.f32.mrf.mxu0
      %v708 = vadd.f32 0.0, %v707
      %709 = vmatmul.f32.gmra.mxu0 %v623
      %v710 = vpop.f32.mrf.mxu0
      %v711 = vadd.f32 0.0, %v710
      %712 = vmatmul.f32.gmra.mxu0 %v624
      %v713 = vpop.f32.mrf.mxu0
      %v714 = vadd.f32 0.0, %v713
      %715 = vmatmul.f32.gmra.mxu0 %v625
      %v716 = vpop.f32.mrf.mxu0
      %v717 = vadd.f32 0.0, %v716
      %718 = vmatmul.f32.gmra.mxu0 %v626
      %v719 = vpop.f32.mrf.mxu0
      %v720 = vadd.f32 0.0, %v719
      %721 = vmatmul.f32.gmra.mxu0 %v627
      %v722 = vpop.f32.mrf.mxu0
      %v723 = vadd.f32 0.0, %v722
      %724 = vmatmul.f32.gmra.mxu0 %v628
      %v725 = vpop.f32.mrf.mxu0
      %v726 = vadd.f32 0.0, %v725
      %727 = vmatmul.f32.gmra.mxu0 %v629
      %v728 = vpop.f32.mrf.mxu0
      %v729 = vadd.f32 0.0, %v728
      %730 = vmatmul.f32.gmra.mxu0 %v630
      %v731 = vpop.f32.mrf.mxu0
      %v732 = vadd.f32 0.0, %v731
      %733 = vmatmul.f32.gmra.mxu0 %v631
      %v734 = vpop.f32.mrf.mxu0
      %v735 = vadd.f32 0.0, %v734
      %736 = vmatmul.f32.gmra.mxu0 %v632
      %v737 = vpop.f32.mrf.mxu0
      %v738 = vadd.f32 0.0, %v737
      %739 = vmatmul.f32.gmra.mxu0 %v633
      %v740 = vpop.f32.mrf.mxu0
      %v741 = vadd.f32 0.0, %v740
      %742 = vmatmul.f32.gmra.mxu0 %v634
      %v743 = vpop.f32.mrf.mxu0
      %v744 = vadd.f32 0.0, %v743
      %745 = vmatmul.f32.gmra.mxu0 %v635
      %v746 = vpop.f32.mrf.mxu0
      %v747 = vadd.f32 0.0, %v746
      %748 = vmatmul.f32.gmra.mxu0 %v636
      %v749 = vpop.f32.mrf.mxu0
      %v750 = vadd.f32 0.0, %v749
      %751 = vmatmul.f32.gmra.mxu0 %v637
      %v752 = vpop.f32.mrf.mxu0
      %v753 = vadd.f32 0.0, %v752
      %754 = vmatmul.f32.gmra.mxu0 %v638
      %v755 = vpop.f32.mrf.mxu0
      %v756 = vadd.f32 0.0, %v755
      %757 = vmatmul.f32.gmra.mxu0 %v639
      %v758 = vpop.f32.mrf.mxu0
      %v759 = vadd.f32 0.0, %v758
      %760 = vmatmul.f32.gmra.mxu0 %v640
      %v761 = vpop.f32.mrf.mxu0
      %v762 = vadd.f32 0.0, %v761
      %763 = vmatmul.f32.gmra.mxu0 %v641
      %v764 = vpop.f32.mrf.mxu0
      %v765 = vadd.f32 0.0, %v764
      %766 = vmatmul.f32.gmra.mxu0 %v642
      %v767 = vpop.f32.mrf.mxu0
      %v768 = vadd.f32 0.0, %v767
      %769 = vmatmul.f32.gmra.mxu0 %v643
      %v770 = vpop.f32.mrf.mxu0
      %v771 = vadd.f32 0.0, %v770
      %772 = vdwg.mxu0
      %773 = vst [vmem:[%s328] sm:$0xff] %v678
      %774 = vst [vmem:[%s328 + $0x8] sm:$0xff] %v681
      %775 = vst [vmem:[%s328 + $0x10] sm:$0xff] %v684
      %776 = vst [vmem:[%s328 + $0x18] sm:$0xff] %v687
      %777 = vst [vmem:[%s328 + $0x20] sm:$0xff] %v690
      %778 = vst [vmem:[%s328 + $0x28] sm:$0xff] %v693
      %779 = vst [vmem:[%s328 + $0x30] sm:$0xff] %v696
      %780 = vst [vmem:[%s328 + $0x38] sm:$0xff] %v699
      %781 = vst [vmem:[%s328 + $0x40] sm:$0xff] %v702
      %782 = vst [vmem:[%s328 + $0x48] sm:$0xff] %v705
      %783 = vst [vmem:[%s328 + $0x50] sm:$0xff] %v708
      %784 = vst [vmem:[%s328 + $0x58] sm:$0xff] %v711
      %785 = vst [vmem:[%s328 + $0x60] sm:$0xff] %v714
      %786 = vst [vmem:[%s328 + $0x68] sm:$0xff] %v717
      %787 = vst [vmem:[%s328 + $0x70] sm:$0xff] %v720
      %788 = vst [vmem:[%s328 + $0x78] sm:$0xff] %v723
      %789 = vst [vmem:[%s328 + $0x80] sm:$0xff] %v726
      %790 = vst [vmem:[%s328 + $0x88] sm:$0xff] %v729
      %791 = vst [vmem:[%s328 + $0x90] sm:$0xff] %v732
      %792 = vst [vmem:[%s328 + $0x98] sm:$0xff] %v735
      %793 = vst [vmem:[%s328 + $0xa0] sm:$0xff] %v738
      %794 = vst [vmem:[%s328 + $0xa8] sm:$0xff] %v741
      %795 = vst [vmem:[%s328 + $0xb0] sm:$0xff] %v744
      %796 = vst [vmem:[%s328 + $0xb8] sm:$0xff] %v747
      %797 = vst [vmem:[%s328 + $0xc0] sm:$0xff] %v750
      %798 = vst [vmem:[%s328 + $0xc8] sm:$0xff] %v753
      %799 = vst [vmem:[%s328 + $0xd0] sm:$0xff] %v756
      %800 = vst [vmem:[%s328 + $0xd8] sm:$0xff] %v759
      %801 = vst [vmem:[%s328 + $0xe0] sm:$0xff] %v762
      %802 = vst [vmem:[%s328 + $0xe8] sm:$0xff] %v765
      %803 = vst [vmem:[%s328 + $0xf0] sm:$0xff] %v768
      %804 = vst [vmem:[%s328 + $0xf8] sm:$0xff] %v771
      %v805 = vadd.f32 %v678, %v681
      %v806 = vadd.f32 %v805, %v684
      %v807 = vadd.f32 %v806, %v687
      %v808 = vadd.f32 %v807, %v690
      %v809 = vadd.f32 %v808, %v693
      %v810 = vadd.f32 %v809, %v696
      %v811 = vadd.f32 %v810, %v699
      %v812 = vadd.f32 %v811, %v702
      %v813 = vadd.f32 %v812, %v705
      %v814 = vadd.f32 %v813, %v708
      %v815 = vadd.f32 %v814, %v711
      %v816 = vadd.f32 %v815, %v714
      %v817 = vadd.f32 %v816, %v717
      %v818 = vadd.f32 %v817, %v720
      %v819 = vadd.f32 %v818, %v723
      %v820 = vadd.f32 %v819, %v726
      %v821 = vadd.f32 %v820, %v729
      %v822 = vadd.f32 %v821, %v732
      %v823 = vadd.f32 %v822, %v735
      %v824 = vadd.f32 %v823, %v738
      %v825 = vadd.f32 %v824, %v741
      %v826 = vadd.f32 %v825, %v744
      %v827 = vadd.f32 %v826, %v747
      %v828 = vadd.f32 %v827, %v750
      %v829 = vadd.f32 %v828, %v753
      %v830 = vadd.f32 %v829, %v756
      %v831 = vadd.f32 %v830, %v759
      %v832 = vadd.f32 %v831, %v762
      %v833 = vadd.f32 %v832, %v765
      %v834 = vadd.f32 %v833, %v768
      %v835 = vadd.f32 %v834, %v771
      %v836 = vrot.slane %v835, 4
      %v837 = vadd.f32 %v835, %v836
      %v838 = vrot.slane %v837, 2
      %v839 = vadd.f32 %v837, %v838
      %v840 = vrot.slane %v839, 1
      %v841 = vadd.f32 %v839, %v840
      %v842 = vmul.f32 %v678, %v678
      %v843 = vmul.f32 %v681, %v681
      %v844 = vmul.f32 %v684, %v684
      %v845 = vmul.f32 %v687, %v687
      %v846 = vmul.f32 %v690, %v690
      %v847 = vmul.f32 %v693, %v693
      %v848 = vmul.f32 %v696, %v696
      %v849 = vmul.f32 %v699, %v699
      %v850 = vmul.f32 %v702, %v702
      %v851 = vmul.f32 %v705, %v705
      %v852 = vmul.f32 %v708, %v708
      %v853 = vmul.f32 %v711, %v711
      %v854 = vmul.f32 %v714, %v714
      %v855 = vmul.f32 %v717, %v717
      %v856 = vmul.f32 %v720, %v720
      %v857 = vmul.f32 %v723, %v723
      %v858 = vmul.f32 %v726, %v726
      %v859 = vmul.f32 %v729, %v729
      %v860 = vmul.f32 %v732, %v732
      %v861 = vmul.f32 %v735, %v735
      %v862 = vmul.f32 %v738, %v738
      %v863 = vmul.f32 %v741, %v741
      %v864 = vmul.f32 %v744, %v744
      %v865 = vmul.f32 %v747, %v747
      %v866 = vmul.f32 %v750, %v750
      %v867 = vmul.f32 %v753, %v753
      %v868 = vmul.f32 %v756, %v756
      %v869 = vmul.f32 %v759, %v759
      %v870 = vmul.f32 %v762, %v762
      %v871 = vmul.f32 %v765, %v765
      %v872 = vmul.f32 %v768, %v768
      %v873 = vmul.f32 %v771, %v771
      %v874 = vadd.f32 %v842, %v843
      %v875 = vadd.f32 %v874, %v844
      %v876 = vadd.f32 %v875, %v845
      %v877 = vadd.f32 %v876, %v846
      %v878 = vadd.f32 %v877, %v847
      %v879 = vadd.f32 %v878, %v848
      %v880 = vadd.f32 %v879, %v849
      %v881 = vadd.f32 %v880, %v850
      %v882 = vadd.f32 %v881, %v851
      %v883 = vadd.f32 %v882, %v852
      %v884 = vadd.f32 %v883, %v853
      %v885 = vadd.f32 %v884, %v854
      %v886 = vadd.f32 %v885, %v855
      %v887 = vadd.f32 %v886, %v856
      %v888 = vadd.f32 %v887, %v857
      %v889 = vadd.f32 %v888, %v858
      %v890 = vadd.f32 %v889, %v859
      %v891 = vadd.f32 %v890, %v860
      %v892 = vadd.f32 %v891, %v861
      %v893 = vadd.f32 %v892, %v862
      %v894 = vadd.f32 %v893, %v863
      %v895 = vadd.f32 %v894, %v864
      %v896 = vadd.f32 %v895, %v865
      %v897 = vadd.f32 %v896, %v866
      %v898 = vadd.f32 %v897, %v867
      %v899 = vadd.f32 %v898, %v868
      %v900 = vadd.f32 %v899, %v869
      %v901 = vadd.f32 %v900, %v870
      %v902 = vadd.f32 %v901, %v871
      %v903 = vadd.f32 %v902, %v872
      %v904 = vadd.f32 %v903, %v873
      %v905 = vrot.slane %v904, 4
      %v906 = vadd.f32 %v904, %v905
      %v907 = vrot.slane %v906, 2
      %v908 = vadd.f32 %v906, %v907
      %v909 = vrot.slane %v908, 1
      %v910 = vadd.f32 %v908, %v909
      %v911 = vld [vmem:[%s333] sm:$0x3]
      %vm912 = vcmask 1040384
      %v913 = vsel %vm912, %v841, %v910
      %v914 = vadd.f32 %v911, %v913
      %915 = vst [vmem:[%s333] sm:$0x3] %v914
      %v916 = vld [vmem:[%s336] sm:$0x1]
      %v917 = vadd.f32 %v916, %v841
      %918 = vst [vmem:[%s336] sm:$0x1] %v917
      %s919 = smul.u32 32, %s24
      %p920 = scmp.lt.s32.totalorder %s23, 3
      %s921 = scalar_select %p920, %s23, 3
      %p922 = scmp.lt.s32.totalorder %s919, 31
      %s923 = scalar_select %p922, %s919, 31
      %s924 = smul.addr %s921, 32
      %s925 = sadd.s32 %s923, %s924
      %s926 = smul.addr %s925, 8
      %s927 = scalar_lea.vmem %s5, %s926
      %p928 = scmp.lt.s32.totalorder %s23, 3
      %s929 = scalar_select %p928, %s23, 3
      %s930 = smul.addr %s929, 2
      %s931 = scalar_lea.vmem %s6, %s930
      %p932 = scmp.lt.s32.totalorder %s23, 3
      %s933 = scalar_select %p932, %s23, 3
      %s934 = scalar_lea.vmem %s7, %s933
      // Predicated region
      $region45: #{se_basic_block.4} parent=39 // pred_check
        %p935 = pneg %p163
      $region46: #{se_basic_block.4} parent=39 // pred_check_branch
        %937 = sbr.rel (%p935) target = $region48
      $region47: #{se_basic_block.4} parent=39 // pred_region
        %s938 = smul.u32 32, %s24
      $region48: #{se_basic_block.4} parent=39 // pred_fallthru
        _
      // Predicated region
      $region49: #{se_basic_block.4} parent=39 // pred_check
        %p939 = pneg %p189
      $region50: #{se_basic_block.4} parent=39 // pred_check_branch
        %941 = sbr.rel (%p939) target = $region52
      $region51: #{se_basic_block.4} parent=39 // pred_region
        _
      $region52: #{se_basic_block.4} parent=39 // pred_fallthru
        _
      // Predicated region
      $region53: #{se_basic_block.4} parent=39 // pred_check
        %p942 = pneg %p215
      $region54: #{se_basic_block.4} parent=39 // pred_check_branch
        %944 = sbr.rel (%p942) target = $region56
      $region55: #{se_basic_block.4} parent=39 // pred_region
        _
      $region56: #{se_basic_block.4} parent=39 // pred_fallthru
        _
    $region40: #{se_basic_block.4} parent=5 // pred_fallthru
      _
    %p945 = scmp.le.s32.totalorder 2, %s14
    // Predicated region
    $region57: #{se_basic_block.4} parent=5 // pred_check
      %p946 = pneg %p945
    $region58: #{se_basic_block.4} parent=5 // pred_check_branch
      %948 = sbr.rel (%p946) target = $region60
    $region59: #{se_basic_block.4} parent=5 // pred_region
      %s949 = ssub.s32 %s14, 2
      // Predicated region
      $region61: #{se_basic_block.4} parent=59 // pred_check
        %p950 = pneg %p169
      $region62: #{se_basic_block.4} parent=59 // pred_check_branch
        %952 = sbr.rel (%p950) target = $region64
      $region63: #{se_basic_block.4} parent=59 // pred_region
        %s953 = smul.u32 32, %s26
        %p954 = scmp.lt.s32.totalorder %s25, 3
        %s955 = scalar_select %p954, %s25, 3
        %p956 = scmp.lt.s32.totalorder %s953, 31
        %s957 = scalar_select %p956, %s953, 31
        %s958 = smul.addr %s955, 32
        %s959 = sadd.s32 %s957, %s958
        %s960 = smul.addr %s959, 8
        %s961 = scalar_lea.vmem %s5, %s960
      $region64: #{se_basic_block.4} parent=59 // pred_fallthru
        _
      // Predicated region
      $region65: #{se_basic_block.4} parent=59 // pred_check
        %p962 = pneg %p195
      $region66: #{se_basic_block.4} parent=59 // pred_check_branch
        %964 = sbr.rel (%p962) target = $region68
      $region67: #{se_basic_block.4} parent=59 // pred_region
        %p965 = scmp.lt.s32.totalorder %s25, 3
        %s966 = scalar_select %p965, %s25, 3
        %s967 = smul.addr %s966, 2
        %s968 = scalar_lea.vmem %s6, %s967
      $region68: #{se_basic_block.4} parent=59 // pred_fallthru
        _
      // Predicated region
      $region69: #{se_basic_block.4} parent=59 // pred_check
        %p969 = pneg %p221
      $region70: #{se_basic_block.4} parent=59 // pred_check_branch
        %971 = sbr.rel (%p969) target = $region72
      $region71: #{se_basic_block.4} parent=59 // pred_region
        %p972 = scmp.lt.s32.totalorder %s25, 3
        %s973 = scalar_select %p972, %s25, 3
        %s974 = scalar_lea.vmem %s7, %s973
      $region72: #{se_basic_block.4} parent=59 // pred_fallthru
        _
    $region60: #{se_basic_block.4} parent=5 // pred_fallthru
      _
  $region6: #{se_basic_block.4} parent=0 // loop_footer
    %s18 = sadd.s32 1, %s14
  $region7: #{se_basic_block.4} parent=0 // loop_footer_branch
    %13 = sbr.rel target = $region3
  $region8: #{se_basic_block.4} parent=0 // loop_exit
    _

// kernel: se_basic_block.5
$region0: #{se_basic_block.5}
  #allocation0 [shape = 'u32[]', space=smem, size = 0x4, offset = 0x4, fixed_abs, tag = 'smem constant byte address 0x4 - core index']
  #allocation1 [shape = 'u32[72,128]{1,0:T(1,128)}', space=vmem, size = 0x9000, scoped, tag = 'internal scratch']
  #allocation2 [shape = 'f32[2,128]{1,0:T(2,128)}', space=vmem, size = 0x400, scoped, tag = 'scratch operand']
  #allocation3 [shape = 'f32[1,128]{1,0:T(1,128)}', space=vmem, size = 0x200, scoped, tag = 'scratch operand']
  %s0 = inlined_call_operand.vmem [shape: f32[4,256,128], index: 0, kind: input, shape index: {}]
  %s1 = inlined_call_operand.vmem [shape: f32[4,256,128], index: 1, kind: input, shape index: {}]
  %s2 = inlined_call_operand.vmem [shape: f32[4,2,128], index: 2, kind: input, shape index: {}]
  %s3 = inlined_call_operand.vmem [shape: f32[4,1,128], index: 3, kind: input, shape index: {}]
  %s4 = inlined_call_operand.vmem [shape: f32[4,128], index: 4, kind: input, shape index: {}]
  %s5 = inlined_call_operand.vmem [shape: f32[128,128], index: 5, kind: input, shape index: {}]
  %s6 = inlined_call_operand.vmem [shape: f32[128,128], index: 6, kind: input, shape index: {}]
  %s7 = inlined_call_operand.vmem [shape: f32[4,256,128], index: 7, kind: output, shape index: {}]
  %s8 = sld [smem:[#allocation0]]
  $region65: #{se_basic_block.5} parent=0
    _
  %s10 = ssub.s32 1, %s8
  %s11 = scalar_select 0, %s10, %s8
  loop: start=0, step=1, limit=6
  $region2: #{se_basic_block.5} parent=0 // loop_pre_header
    _
  $region3: #{se_basic_block.5} parent=0 // loop_header
    %s13 = sphi 0, %s17
    %p14 = scmp.ge.s32.totalorder %s13, 6
    %s20 = sphi 0, %s32
    %s21 = sphi 0, %s28
    %s22 = sphi 0, %s20
    %s23 = sphi 0, %s21
    %s24 = sphi 0, %s22
    %s25 = sphi 0, %s23
    %s37 = sphi 0, %s39
    %s40 = sphi 0, %s37
    %s41 = sphi 0, %s40
    %s57 = sphi 0, %s41
    %s65 = sphi 0, %s67
    %s68 = sphi 0, %s65
    %s69 = sphi 0, %s68
    %s85 = sphi 0, %s69
    %s89 = sphi 0, %s89
    %s91 = sphi 0, %s89
    %s92 = sphi 0, %s91
    %s106 = sphi 0, %s92
    %s112 = sphi 0, %s114
    %s115 = sphi 0, %s112
    %s116 = sphi 0, %s115
    %s132 = sphi 0, %s116
    %s136 = sphi 0, %s136
    %s138 = sphi 0, %s136
    %s139 = sphi 0, %s138
    %s153 = sphi 0, %s139
    %s157 = sphi 0, %s157
    %s159 = sphi 0, %s157
    %s160 = sphi 0, %s159
    %s174 = sphi 0, %s160
    %s178 = sphi 0, %s178
    %s180 = sphi 0, %s178
    %s181 = sphi 0, %s180
    %s195 = sphi 0, %s181
    %s203 = sphi 0, %s205
    %s206 = sphi 0, %s203
    %s207 = sphi 0, %s206
    %s223 = sphi 0, %s207
  $region4: #{se_basic_block.5} parent=0 // loop_header_branch
    %16 = sbr.rel (%p14) target = $region8
  $region5: #{se_basic_block.5} parent=0 // loop_body
    %s18 = ssub.s32 %s13, 1
    %s19 = ssub.s32 %s13, 2
    %s26 = sadd.s32 1, %s21
    %p27 = scmp.ge.s32.totalorder %s26, 1
    %s28 = scalar_select %p27, 0, %s26
    %s29 = sadd.s32 1, %s20
    %s30 = scalar_select %p27, %s29, %s20
    %p31 = scmp.ge.s32.totalorder %s30, 4
    %s32 = scalar_select %p31, 0, %s30
    %s33 = ssub.s32 %s20, %s32
    %s34 = ssub.s32 %s21, %s28
    %s35 = sor.u32 %s33, %s34
    %p36 = scmp.eq.s32.totalorder %s35, 0
    %s38 = sadd.s32 %s37, 1
    %s39 = scalar_select %p36, %s37, %s38
    %p42 = pneg %p36
    %p43 = scmp.eq.s32.totalorder %s13, 3
    %p44 = por %p42, %p43
    %p45 = scmp.ne.s32.totalorder %s37, %s40
    %p46 = scmp.eq.s32.totalorder %s13, 0
    %p47 = por %p45, %p46
    %p48 = scmp.ne.s32.totalorder %s37, %s40
    %p49 = scmp.eq.s32.totalorder %s18, 3
    %p50 = por %p48, %p49
    %p51 = scmp.ne.s32.totalorder %s40, %s41
    %p52 = scmp.eq.s32.totalorder %s18, 0
    %p53 = por %p51, %p52
    %p54 = scmp.ne.s32.totalorder %s40, %s41
    %p55 = scmp.eq.s32.totalorder %s19, 3
    %p56 = por %p54, %p55
    %p58 = scmp.ne.s32.totalorder %s41, %s57
    %p59 = scmp.eq.s32.totalorder %s19, 0
    %p60 = por %p58, %p59
    %s61 = ssub.s32 %s20, %s32
    %s62 = ssub.s32 %s21, %s28
    %s63 = sor.u32 %s61, %s62
    %p64 = scmp.eq.s32.totalorder %s63, 0
    %s66 = sadd.s32 %s65, 1
    %s67 = scalar_select %p64, %s65, %s66
    %p70 = pneg %p64
    %p71 = scmp.eq.s32.totalorder %s13, 3
    %p72 = por %p70, %p71
    %p73 = scmp.ne.s32.totalorder %s65, %s68
    %p74 = scmp.eq.s32.totalorder %s13, 0
    %p75 = por %p73, %p74
    %p76 = scmp.ne.s32.totalorder %s65, %s68
    %p77 = scmp.eq.s32.totalorder %s18, 3
    %p78 = por %p76, %p77
    %p79 = scmp.ne.s32.totalorder %s68, %s69
    %p80 = scmp.eq.s32.totalorder %s18, 0
    %p81 = por %p79, %p80
    %p82 = scmp.ne.s32.totalorder %s68, %s69
    %p83 = scmp.eq.s32.totalorder %s19, 3
    %p84 = por %p82, %p83
    %p86 = scmp.ne.s32.totalorder %s69, %s85
    %p87 = scmp.eq.s32.totalorder %s19, 0
    %p88 = por %p86, %p87
    %s90 = sadd.s32 %s89, 1
    %p93 = scmp.eq.s32.totalorder %s13, 3
    %p94 = scmp.ne.s32.totalorder %s89, %s91
    %p95 = scmp.eq.s32.totalorder %s13, 0
    %p96 = por %p94, %p95
    %p97 = scmp.ne.s32.totalorder %s89, %s91
    %p98 = scmp.eq.s32.totalorder %s18, 3
    %p99 = por %p97, %p98
    %p100 = scmp.ne.s32.totalorder %s91, %s92
    %p101 = scmp.eq.s32.totalorder %s18, 0
    %p102 = por %p100, %p101
    %p103 = scmp.ne.s32.totalorder %s91, %s92
    %p104 = scmp.eq.s32.totalorder %s19, 3
    %p105 = por %p103, %p104
    %p107 = scmp.ne.s32.totalorder %s92, %s106
    %p108 = scmp.eq.s32.totalorder %s19, 0
    %p109 = por %p107, %p108
    %s110 = ssub.s32 %s20, %s32
    %p111 = scmp.eq.s32.totalorder %s110, 0
    %s113 = sadd.s32 %s112, 1
    %s114 = scalar_select %p111, %s112, %s113
    %p117 = pneg %p111
    %p118 = scmp.eq.s32.totalorder %s13, 3
    %p119 = por %p117, %p118
    %p120 = scmp.ne.s32.totalorder %s112, %s115
    %p121 = scmp.eq.s32.totalorder %s13, 0
    %p122 = por %p120, %p121
    %p123 = scmp.ne.s32.totalorder %s112, %s115
    %p124 = scmp.eq.s32.totalorder %s18, 3
    %p125 = por %p123, %p124
    %p126 = scmp.ne.s32.totalorder %s115, %s116
    %p127 = scmp.eq.s32.totalorder %s18, 0
    %p128 = por %p126, %p127
    %p129 = scmp.ne.s32.totalorder %s115, %s116
    %p130 = scmp.eq.s32.totalorder %s19, 3
    %p131 = por %p129, %p130
    %p133 = scmp.ne.s32.totalorder %s116, %s132
    %p134 = scmp.eq.s32.totalorder %s19, 0
    %p135 = por %p133, %p134
    %s137 = sadd.s32 %s136, 1
    %p140 = scmp.eq.s32.totalorder %s13, 3
    %p141 = scmp.ne.s32.totalorder %s136, %s138
    %p142 = scmp.eq.s32.totalorder %s13, 0
    %p143 = por %p141, %p142
    %p144 = scmp.ne.s32.totalorder %s136, %s138
    %p145 = scmp.eq.s32.totalorder %s18, 3
    %p146 = por %p144, %p145
    %p147 = scmp.ne.s32.totalorder %s138, %s139
    %p148 = scmp.eq.s32.totalorder %s18, 0
    %p149 = por %p147, %p148
    %p150 = scmp.ne.s32.totalorder %s138, %s139
    %p151 = scmp.eq.s32.totalorder %s19, 3
    %p152 = por %p150, %p151
    %p154 = scmp.ne.s32.totalorder %s139, %s153
    %p155 = scmp.eq.s32.totalorder %s19, 0
    %p156 = por %p154, %p155
    %s158 = sadd.s32 %s157, 1
    %p161 = scmp.eq.s32.totalorder %s13, 3
    %p162 = scmp.ne.s32.totalorder %s157, %s159
    %p163 = scmp.eq.s32.totalorder %s13, 0
    %p164 = por %p162, %p163
    %p165 = scmp.ne.s32.totalorder %s157, %s159
    %p166 = scmp.eq.s32.totalorder %s18, 3
    %p167 = por %p165, %p166
    %p168 = scmp.ne.s32.totalorder %s159, %s160
    %p169 = scmp.eq.s32.totalorder %s18, 0
    %p170 = por %p168, %p169
    %p171 = scmp.ne.s32.totalorder %s159, %s160
    %p172 = scmp.eq.s32.totalorder %s19, 3
    %p173 = por %p171, %p172
    %p175 = scmp.ne.s32.totalorder %s160, %s174
    %p176 = scmp.eq.s32.totalorder %s19, 0
    %p177 = por %p175, %p176
    %s179 = sadd.s32 %s178, 1
    %p182 = scmp.eq.s32.totalorder %s13, 3
    %p183 = scmp.ne.s32.totalorder %s178, %s180
    %p184 = scmp.eq.s32.totalorder %s13, 0
    %p185 = por %p183, %p184
    %p186 = scmp.ne.s32.totalorder %s178, %s180
    %p187 = scmp.eq.s32.totalorder %s18, 3
    %p188 = por %p186, %p187
    %p189 = scmp.ne.s32.totalorder %s180, %s181
    %p190 = scmp.eq.s32.totalorder %s18, 0
    %p191 = por %p189, %p190
    %p192 = scmp.ne.s32.totalorder %s180, %s181
    %p193 = scmp.eq.s32.totalorder %s19, 3
    %p194 = por %p192, %p193
    %p196 = scmp.ne.s32.totalorder %s181, %s195
    %p197 = scmp.eq.s32.totalorder %s19, 0
    %p198 = por %p196, %p197
    %s199 = ssub.s32 %s20, %s32
    %s200 = ssub.s32 %s21, %s28
    %s201 = sor.u32 %s199, %s200
    %p202 = scmp.eq.s32.totalorder %s201, 0
    %s204 = sadd.s32 %s203, 1
    %s205 = scalar_select %p202, %s203, %s204
    %p208 = pneg %p202
    %p209 = scmp.eq.s32.totalorder %s13, 3
    %p210 = por %p208, %p209
    %p211 = scmp.ne.s32.totalorder %s203, %s206
    %p212 = scmp.eq.s32.totalorder %s13, 0
    %p213 = por %p211, %p212
    %p214 = scmp.ne.s32.totalorder %s203, %s206
    %p215 = scmp.eq.s32.totalorder %s18, 3
    %p216 = por %p214, %p215
    %p217 = scmp.ne.s32.totalorder %s206, %s207
    %p218 = scmp.eq.s32.totalorder %s18, 0
    %p219 = por %p217, %p218
    %p220 = scmp.ne.s32.totalorder %s206, %s207
    %p221 = scmp.eq.s32.totalorder %s19, 3
    %p222 = por %p220, %p221
    %p224 = scmp.ne.s32.totalorder %s207, %s223
    %p225 = scmp.eq.s32.totalorder %s19, 0
    %p226 = por %p224, %p225
    %p227 = scmp.le.s32.totalorder 1, %s13
    %p228 = scmp.lt.s32.totalorder %s13, 5
    %p229 = pnand %p227, %p228
    %p230 = pneg %p229
    // Predicated region
    $region9: #{se_basic_block.5} parent=5 // pred_check
      _
    $region10: #{se_basic_block.5} parent=5 // pred_check_branch
      %232 = sbr.rel (%p229) target = $region12
    $region11: #{se_basic_block.5} parent=5 // pred_region
      %s233 = ssub.s32 %s13, 1
      // Predicated region
      $region13: #{se_basic_block.5} parent=11 // pred_check
        %p234 = pneg %p102
      $region14: #{se_basic_block.5} parent=11 // pred_check_branch
        %236 = sbr.rel (%p234) target = $region16
      $region15: #{se_basic_block.5} parent=11 // pred_region
        _
      $region16: #{se_basic_block.5} parent=11 // pred_fallthru
        _
      // Predicated region
      $region17: #{se_basic_block.5} parent=11 // pred_check
        %p237 = pneg %p149
      $region18: #{se_basic_block.5} parent=11 // pred_check_branch
        %239 = sbr.rel (%p237) target = $region20
      $region19: #{se_basic_block.5} parent=11 // pred_region
        _
      $region20: #{se_basic_block.5} parent=11 // pred_fallthru
        _
      // Predicated region
      $region21: #{se_basic_block.5} parent=11 // pred_check
        %p240 = pneg %p170
      $region22: #{se_basic_block.5} parent=11 // pred_check_branch
        %242 = sbr.rel (%p240) target = $region24
      $region23: #{se_basic_block.5} parent=11 // pred_region
        _
      $region24: #{se_basic_block.5} parent=11 // pred_fallthru
        _
      // Predicated region
      $region25: #{se_basic_block.5} parent=11 // pred_check
        %p243 = pneg %p191
      $region26: #{se_basic_block.5} parent=11 // pred_check_branch
        %245 = sbr.rel (%p243) target = $region28
      $region27: #{se_basic_block.5} parent=11 // pred_region
        _
      $region28: #{se_basic_block.5} parent=11 // pred_fallthru
        _
    $region12: #{se_basic_block.5} parent=5 // pred_fallthru
      _
    %p246 = scmp.lt.s32.totalorder %s13, 4
    // Predicated region
    $region29: #{se_basic_block.5} parent=5 // pred_check
      %p247 = pneg %p246
    $region30: #{se_basic_block.5} parent=5 // pred_check_branch
      %249 = sbr.rel (%p247) target = $region32
    $region31: #{se_basic_block.5} parent=5 // pred_region
      // Predicated region
      $region33: #{se_basic_block.5} parent=31 // pred_check
        %p250 = pneg %p47
      $region34: #{se_basic_block.5} parent=31 // pred_check_branch
        %252 = sbr.rel (%p250) target = $region36
      $region35: #{se_basic_block.5} parent=31 // pred_region
        %s253 = smul.u32 32, %s21
        %p254 = scmp.lt.s32.totalorder %s20, 3
        %s255 = scalar_select %p254, %s20, 3
        %p256 = scmp.lt.s32.totalorder %s253, 31
        %s257 = scalar_select %p256, %s253, 31
        %s258 = smul.addr %s255, 32
        %s259 = sadd.s32 %s257, %s258
        %s260 = smul.addr %s259, 8
        %s261 = scalar_lea.vmem %s0, %s260
        %s262 = smul.u32 32, %s21
      $region36: #{se_basic_block.5} parent=31 // pred_fallthru
        _
      // Predicated region
      $region37: #{se_basic_block.5} parent=31 // pred_check
        %p263 = pneg %p75
      $region38: #{se_basic_block.5} parent=31 // pred_check_branch
        %265 = sbr.rel (%p263) target = $region40
      $region39: #{se_basic_block.5} parent=31 // pred_region
        %s266 = smul.u32 32, %s21
        %p267 = scmp.lt.s32.totalorder %s20, 3
        %s268 = scalar_select %p267, %s20, 3
        %p269 = scmp.lt.s32.totalorder %s266, 31
        %s270 = scalar_select %p269, %s266, 31
        %s271 = smul.addr %s268, 32
        %s272 = sadd.s32 %s270, %s271
        %s273 = smul.addr %s272, 8
        %s274 = scalar_lea.vmem %s1, %s273
        %s275 = smul.u32 32, %s21
      $region40: #{se_basic_block.5} parent=31 // pred_fallthru
        _
      // Predicated region
      $region41: #{se_basic_block.5} parent=31 // pred_check
        %p276 = pneg %p122
      $region42: #{se_basic_block.5} parent=31 // pred_check_branch
        %278 = sbr.rel (%p276) target = $region44
      $region43: #{se_basic_block.5} parent=31 // pred_region
        %p279 = scmp.lt.s32.totalorder %s20, 3
        %s280 = scalar_select %p279, %s20, 3
        %s281 = scalar_lea.vmem %s3, %s280
      $region44: #{se_basic_block.5} parent=31 // pred_fallthru
        _
    $region32: #{se_basic_block.5} parent=5 // pred_fallthru
      _
    %p282 = scmp.le.s32.totalorder 1, %s13
    %p283 = scmp.lt.s32.totalorder %s13, 5
    %p284 = pnand %p282, %p283
    %p285 = pneg %p284
    // Predicated region
    $region45: #{se_basic_block.5} parent=5 // pred_check
      _
    $region46: #{se_basic_block.5} parent=5 // pred_check_branch
      %287 = sbr.rel (%p284) target = $region48
    $region47: #{se_basic_block.5} parent=5 // pred_region
      %s288 = ssub.s32 %s13, 1
      %s289 = smul.u32 32, %s23
      %p290 = scmp.lt.s32.totalorder %s22, 3
      %s291 = scalar_select %p290, %s22, 3
      %p292 = scmp.lt.s32.totalorder %s289, 31
      %s293 = scalar_select %p292, %s289, 31
      %s294 = smul.addr %s291, 32
      %s295 = sadd.s32 %s293, %s294
      %s296 = smul.addr %s295, 8
      %s297 = scalar_lea.vmem %s0, %s296
      %p298 = pneg %p53
      %p299 = pneg %p50
      %s300 = smul.u32 32, %s23
      %p301 = scmp.lt.s32.totalorder %s22, 3
      %s302 = scalar_select %p301, %s22, 3
      %p303 = scmp.lt.s32.totalorder %s300, 31
      %s304 = scalar_select %p303, %s300, 31
      %s305 = smul.addr %s302, 32
      %s306 = sadd.s32 %s304, %s305
      %s307 = smul.addr %s306, 8
      %s308 = scalar_lea.vmem %s1, %s307
      %p309 = pneg %p81
      %p310 = pneg %p78
      %p311 = pneg %p102
      %p312 = pneg %p99
      %p313 = scmp.lt.s32.totalorder %s22, 3
      %s314 = scalar_select %p313, %s22, 3
      %s315 = scalar_lea.vmem %s3, %s314
      %p316 = pneg %p128
      %p317 = pneg %p125
      %p318 = pneg %p149
      %p319 = pneg %p146
      %p320 = pneg %p170
      %p321 = pneg %p167
      %p322 = pneg %p191
      %p323 = pneg %p188
      %p324 = pneg %p219
      %p325 = pneg %p216
      %s326 = smul.u32 32, %s23
      %p327 = scmp.lt.s32.totalorder %s22, 3
      %s328 = scalar_select %p327, %s22, 3
      %p329 = scmp.lt.s32.totalorder %s326, 31
      %s330 = scalar_select %p329, %s326, 31
      %s331 = smul.addr %s328, 32
      %s332 = sadd.s32 %s330, %s331
      %s333 = smul.addr %s332, 8
      %s334 = scalar_lea.vmem %s7, %s333
      %s335 = smul.u32 32, %s23
      %p336 = scmp.lt.s32.totalorder %s22, 3
      %s337 = scalar_select %p336, %s22, 3
      %p338 = scmp.lt.s32.totalorder %s335, 31
      %s339 = scalar_select %p338, %s335, 31
      %s340 = smul.addr %s337, 32
      %s341 = sadd.s32 %s339, %s340
      %s342 = smul.addr %s341, 8
      %s343 = scalar_lea.vmem %s0, %s342
      %s344 = smul.u32 32, %s23
      %s345 = smul.u32 32, %s23
      %p346 = scmp.lt.s32.totalorder %s22, 3
      %s347 = scalar_select %p346, %s22, 3
      %p348 = scmp.lt.s32.totalorder %s345, 31
      %s349 = scalar_select %p348, %s345, 31
      %s350 = smul.addr %s347, 32
      %s351 = sadd.s32 %s349, %s350
      %s352 = smul.addr %s351, 8
      %s353 = scalar_lea.vmem %s1, %s352
      %s354 = smul.u32 32, %s23
      %p355 = scmp.lt.s32.totalorder %s22, 3
      %s356 = scalar_select %p355, %s22, 3
      %s357 = scalar_lea.vmem %s3, %s356
      %s358 = smul.u32 32, %s23
      %p359 = scmp.lt.s32.totalorder %s22, 3
      %s360 = scalar_select %p359, %s22, 3
      %p361 = scmp.lt.s32.totalorder %s358, 31
      %s362 = scalar_select %p361, %s358, 31
      %s363 = smul.addr %s360, 32
      %s364 = sadd.s32 %s362, %s363
      %s365 = smul.addr %s364, 8
      %s366 = scalar_lea.vmem %s7, %s365
      %s367 = smul.u32 32, %s23
      %p368 = scmp.eq.s32.totalorder %s23, 0
      // Predicated region
      $region49: #{se_basic_block.5} parent=47 // pred_check
        %p369 = pneg %p368
      $region50: #{se_basic_block.5} parent=47 // pred_check_branch
        %371 = sbr.rel (%p369) target = $region52
      $region51: #{se_basic_block.5} parent=47 // pred_region
        %v372 = vld [vmem:[%s2] sm:$0x3]
        %v373 = vld [vmem:[%s2 + $0x2] sm:$0x3]
        %v374 = vld [vmem:[%s2 + $0x4] sm:$0x3]
        %v375 = vld [vmem:[%s2 + $0x6] sm:$0x3]
        %vm376 = vcmask 1041408
        %v377 = vsel %vm376, %v372, 0.0
        %v378 = vsel %vm376, %v373, 0.0
        %v379 = vadd.f32 %v377, %v378
        %v380 = vsel %vm376, %v374, 0.0
        %v381 = vadd.f32 %v379, %v380
        %v382 = vsel %vm376, %v375, 0.0
        %v383 = vadd.f32 %v381, %v382
        %v384 = vmul.f32 %v383, 0.0009765625
        %v385 = vmul.f32 %v384, %v384
        %v387 = vrot.slane %v385, 7
        %v389 = vsub.f32 %v384, %v387
        %v390 = vadd.f32 %v389, 1e-05
        %v391 = vrsqrt.pop %v390
        %v392 = vmul.f32 %v391, %v390
        %v393 = vmul.f32 %v392, %v391
        %v394 = vmul.f32 0.5, %v393
        %v395 = vsub.f32 1.5, %v394
        %v396 = vmul.f32 %v391, %v395
        %vm397 = vweird.f32 %v390
        %vm398 = vweird.f32 %v391
        %vm399 = vmor %vm397, %vm398
        %v400 = vsel %vm399, %v391, %v396
        %v401 = vld [vmem:[%s4 + $0x2] sm:$0x1]
        %v403 = vrot.slane %v401, 7
        %v405 = vmul.f32 %v400, %v403
        %v406 = vld [vmem:[%s4 + $0x3] sm:$0x1]
        %v408 = vrot.slane %v405, 1
        %v410 = vmul.f32 %v384, %v408
        %v411 = vsub.f32 %v406, %v410
        %v413 = vrot.slane %v411, 7
        %vm415 = vcmask 1040384
        %v416 = vsel %vm415, %v408, %v413
        %417 = vst [vmem:[#allocation2] sm:$0x3] %v416
        %v418 = vld [vmem:[%s357] sm:$0x1]
        %v419 = vmul.f32 %v418, 0.00390625
        %420 = vst [vmem:[#allocation1] sm:$0xff] %v405
        %s421 = scalar_lea.vmem [#allocation1], 1
        %v422 = vld [vmem:[%s421] ss:$9 sm:$0xff]
        %v424 = vmul.f32 %v419, %v422
        %v425 = vadd.f32 %v424, %v411
        %v426 = vld [vmem:[%s5] sm:$0xff]
        %v427 = vld [vmem:[%s5 + $0x8] sm:$0xff]
        %v428 = vld [vmem:[%s5 + $0x10] sm:$0xff]
        %v429 = vld [vmem:[%s5 + $0x18] sm:$0xff]
        %v430 = vld [vmem:[%s5 + $0x20] sm:$0xff]
        %v431 = vld [vmem:[%s5 + $0x28] sm:$0xff]
        %v432 = vld [vmem:[%s5 + $0x30] sm:$0xff]
        %v433 = vld [vmem:[%s5 + $0x38] sm:$0xff]
        %v434 = vld [vmem:[%s5 + $0x40] sm:$0xff]
        %v435 = vld [vmem:[%s5 + $0x48] sm:$0xff]
        %v436 = vld [vmem:[%s5 + $0x50] sm:$0xff]
        %v437 = vld [vmem:[%s5 + $0x58] sm:$0xff]
        %v438 = vld [vmem:[%s5 + $0x60] sm:$0xff]
        %v439 = vld [vmem:[%s5 + $0x68] sm:$0xff]
        %v440 = vld [vmem:[%s5 + $0x70] sm:$0xff]
        %v441 = vld [vmem:[%s5 + $0x78] sm:$0xff]
        %442 = vmatpush.msra.mxu0 %v441
        %443 = vmatpush.msra.mxu0 %v440
        %444 = vmatpush.msra.mxu0 %v439
        %445 = vmatpush.msra.mxu0 %v438
        %446 = vmatpush.msra.mxu0 %v437
        %447 = vmatpush.msra.mxu0 %v436
        %448 = vmatpush.msra.mxu0 %v435
        %449 = vmatpush.msra.mxu0 %v434
        %450 = vmatpush.msra.mxu0 %v433
        %451 = vmatpush.msra.mxu0 %v432
        %452 = vmatpush.msra.mxu0 %v431
        %453 = vmatpush.msra.mxu0 %v430
        %454 = vmatpush.msra.mxu0 %v429
        %455 = vmatpush.msra.mxu0 %v428
        %456 = vmatpush.msra.mxu0 %v427
        %457 = vmatpush.msra.mxu0 %v426
        %458 = vmatmul.f32.gmra.mxu0 %v425
        %v459 = vpop.f32.mrf.mxu0
        %v460 = vadd.f32 0.0, %v459
        %461 = vdwg.mxu0
        %v462 = vmax.f32 %v460, 0.0
        %v463 = vld [vmem:[%s6] sm:$0xff]
        %v464 = vld [vmem:[%s6 + $0x8] sm:$0xff]
        %v465 = vld [vmem:[%s6 + $0x10] sm:$0xff]
        %v466 = vld [vmem:[%s6 + $0x18] sm:$0xff]
        %v467 = vld [vmem:[%s6 + $0x20] sm:$0xff]
        %v468 = vld [vmem:[%s6 + $0x28] sm:$0xff]
        %v469 = vld [vmem:[%s6 + $0x30] sm:$0xff]
        %v470 = vld [vmem:[%s6 + $0x38] sm:$0xff]
        %v471 = vld [vmem:[%s6 + $0x40] sm:$0xff]
        %v472 = vld [vmem:[%s6 + $0x48] sm:$0xff]
        %v473 = vld [vmem:[%s6 + $0x50] sm:$0xff]
        %v474 = vld [vmem:[%s6 + $0x58] sm:$0xff]
        %v475 = vld [vmem:[%s6 + $0x60] sm:$0xff]
        %v476 = vld [vmem:[%s6 + $0x68] sm:$0xff]
        %v477 = vld [vmem:[%s6 + $0x70] sm:$0xff]
        %v478 = vld [vmem:[%s6 + $0x78] sm:$0xff]
        %479 = vmatpush.msra.mxu0 %v478
        %480 = vmatpush.msra.mxu0 %v477
        %481 = vmatpush.msra.mxu0 %v476
        %482 = vmatpush.msra.mxu0 %v475
        %483 = vmatpush.msra.mxu0 %v474
        %484 = vmatpush.msra.mxu0 %v473
        %485 = vmatpush.msra.mxu0 %v472
        %486 = vmatpush.msra.mxu0 %v471
        %487 = vmatpush.msra.mxu0 %v470
        %488 = vmatpush.msra.mxu0 %v469
        %489 = vmatpush.msra.mxu0 %v468
        %490 = vmatpush.msra.mxu0 %v467
        %491 = vmatpush.msra.mxu0 %v466
        %492 = vmatpush.msra.mxu0 %v465
        %493 = vmatpush.msra.mxu0 %v464
        %494 = vmatpush.msra.mxu0 %v463
        %495 = vmatmul.f32.gmra.mxu0 %v462
        %v496 = vpop.f32.mrf.mxu0
        %v497 = vadd.f32 0.0, %v496
        %498 = vdwg.mxu0
        %v499 = vxor.u32 %v497, 2147483648
        %v500 = vmul.f32 %v499, 1.442695
        %v501 = vpow.pop %v500
        %v502 = vadd.f32 %v501, 1.0
        %v503 = vrcp.pop %v502
        %v504 = vmul.f32 %v502, %v503
        %v505 = vsub.f32 1.0, %v504
        %v506 = vmul.f32 %v503, %v505
        %v507 = vadd.f32 %v503, %v506
        %vm508 = vweird.f32 %v502
        %vm509 = vweird.f32 %v503
        %vm510 = vmor %vm508, %vm509
        %v511 = vsel %vm510, %v503, %v507
        %v512 = vand.u32 2147483647, %v502
        %vm513 = vcmp.eq.f32.partialorder %v512, 8.507059e+37
        %v514 = vand.u32 %v502, 2147483648
        %v515 = vor.u32 1.1754944e-38, %v514
        %v516 = vsel %vm513, %v515, %v511
        %v517 = vmul.f32 1.0, %v516
        %518 = vst [vmem:[#allocation3] sm:$0x1] %v517
      $region52: #{se_basic_block.5} parent=47 // pred_fallthru
        _
      %v519 = vld [vmem:[%s343] sm:$0xff]
      %v520 = vld [vmem:[%s343 + $0x8] sm:$0xff]
      %v521 = vld [vmem:[%s343 + $0x10] sm:$0xff]
      %v522 = vld [vmem:[%s343 + $0x18] sm:$0xff]
      %v523 = vld [vmem:[%s343 + $0x20] sm:$0xff]
      %v524 = vld [vmem:[%s343 + $0x28] sm:$0xff]
      %v525 = vld [vmem:[%s343 + $0x30] sm:$0xff]
      %v526 = vld [vmem:[%s343 + $0x38] sm:$0xff]
      %v527 = vld [vmem:[%s343 + $0x40] sm:$0xff]
      %v528 = vld [vmem:[%s343 + $0x48] sm:$0xff]
      %v529 = vld [vmem:[%s343 + $0x50] sm:$0xff]
      %v530 = vld [vmem:[%s343 + $0x58] sm:$0xff]
      %v531 = vld [vmem:[%s343 + $0x60] sm:$0xff]
      %v532 = vld [vmem:[%s343 + $0x68] sm:$0xff]
      %v533 = vld [vmem:[%s343 + $0x70] sm:$0xff]
      %v534 = vld [vmem:[%s343 + $0x78] sm:$0xff]
      %v535 = vld [vmem:[%s343 + $0x80] sm:$0xff]
      %v536 = vld [vmem:[%s343 + $0x88] sm:$0xff]
      %v537 = vld [vmem:[%s343 + $0x90] sm:$0xff]
      %v538 = vld [vmem:[%s343 + $0x98] sm:$0xff]
      %v539 = vld [vmem:[%s343 + $0xa0] sm:$0xff]
      %v540 = vld [vmem:[%s343 + $0xa8] sm:$0xff]
      %v541 = vld [vmem:[%s343 + $0xb0] sm:$0xff]
      %v542 = vld [vmem:[%s343 + $0xb8] sm:$0xff]
      %v543 = vld [vmem:[%s343 + $0xc0] sm:$0xff]
      %v544 = vld [vmem:[%s343 + $0xc8] sm:$0xff]
      %v545 = vld [vmem:[%s343 + $0xd0] sm:$0xff]
      %v546 = vld [vmem:[%s343 + $0xd8] sm:$0xff]
      %v547 = vld [vmem:[%s343 + $0xe0] sm:$0xff]
      %v548 = vld [vmem:[%s343 + $0xe8] sm:$0xff]
      %v549 = vld [vmem:[%s343 + $0xf0] sm:$0xff]
      %v550 = vld [vmem:[%s343 + $0xf8] sm:$0xff]
      %v551 = vld [vmem:[#allocation2] sm:$0x1]
      %v552 = vperm.slane %v551, 0
      %v553 = vmul.f32 %v519, %v552
      %v554 = vmul.f32 %v520, %v552
      %v555 = vmul.f32 %v521, %v552
      %v556 = vmul.f32 %v522, %v552
      %v557 = vmul.f32 %v523, %v552
      %v558 = vmul.f32 %v524, %v552
      %v559 = vmul.f32 %v525, %v552
      %v560 = vmul.f32 %v526, %v552
      %v561 = vmul.f32 %v527, %v552
      %v562 = vmul.f32 %v528, %v552
      %v563 = vmul.f32 %v529, %v552
      %v564 = vmul.f32 %v530, %v552
      %v565 = vmul.f32 %v531, %v552
      %v566 = vmul.f32 %v532, %v552
      %v567 = vmul.f32 %v533, %v552
      %v568 = vmul.f32 %v534, %v552
      %v569 = vmul.f32 %v535, %v552
      %v570 = vmul.f32 %v536, %v552
      %v571 = vmul.f32 %v537, %v552
      %v572 = vmul.f32 %v538, %v552
      %v573 = vmul.f32 %v539, %v552
      %v574 = vmul.f32 %v540, %v552
      %v575 = vmul.f32 %v541, %v552
      %v576 = vmul.f32 %v542, %v552
      %v577 = vmul.f32 %v543, %v552
      %v578 = vmul.f32 %v544, %v552
      %v579 = vmul.f32 %v545, %v552
      %v580 = vmul.f32 %v546, %v552
      %v581 = vmul.f32 %v547, %v552
      %v582 = vmul.f32 %v548, %v552
      %v583 = vmul.f32 %v549, %v552
      %v584 = vmul.f32 %v550, %v552
      %v585 = vld [vmem:[#allocation2 + $0x1] sm:$0x1]
      %v586 = vperm.slane %v585, 0
      %v587 = vadd.f32 %v553, %v586
      %v588 = vadd.f32 %v554, %v586
      %v589 = vadd.f32 %v555, %v586
      %v590 = vadd.f32 %v556, %v586
      %v591 = vadd.f32 %v557, %v586
      %v592 = vadd.f32 %v558, %v586
      %v593 = vadd.f32 %v559, %v586
      %v594 = vadd.f32 %v560, %v586
      %v595 = vadd.f32 %v561, %v586
      %v596 = vadd.f32 %v562, %v586
      %v597 = vadd.f32 %v563, %v586
      %v598 = vadd.f32 %v564, %v586
      %v599 = vadd.f32 %v565, %v586
      %v600 = vadd.f32 %v566, %v586
      %v601 = vadd.f32 %v567, %v586
      %v602 = vadd.f32 %v568, %v586
      %v603 = vadd.f32 %v569, %v586
      %v604 = vadd.f32 %v570, %v586
      %v605 = vadd.f32 %v571, %v586
      %v606 = vadd.f32 %v572, %v586
      %v607 = vadd.f32 %v573, %v586
      %v608 = vadd.f32 %v574, %v586
      %v609 = vadd.f32 %v575, %v586
      %v610 = vadd.f32 %v576, %v586
      %v611 = vadd.f32 %v577, %v586
      %v612 = vadd.f32 %v578, %v586
      %v613 = vadd.f32 %v579, %v586
      %v614 = vadd.f32 %v580, %v586
      %v615 = vadd.f32 %v581, %v586
      %v616 = vadd.f32 %v582, %v586
      %v617 = vadd.f32 %v583, %v586
      %v618 = vadd.f32 %v584, %v586
      %v619 = vld [vmem:[#allocation3] sm:$0x1]
      %v621 = vperm.slane %v619, 0
      %v623 = vmul.f32 %v587, %v621
      %v624 = vmul.f32 %v588, %v621
      %v625 = vmul.f32 %v589, %v621
      %v626 = vmul.f32 %v590, %v621
      %v627 = vmul.f32 %v591, %v621
      %v628 = vmul.f32 %v592, %v621
      %v629 = vmul.f32 %v593, %v621
      %v630 = vmul.f32 %v594, %v621
      %v631 = vmul.f32 %v595, %v621
      %v632 = vmul.f32 %v596, %v621
      %v633 = vmul.f32 %v597, %v621
      %v634 = vmul.f32 %v598, %v621
      %v635 = vmul.f32 %v599, %v621
      %v636 = vmul.f32 %v600, %v621
      %v637 = vmul.f32 %v601, %v621
      %v638 = vmul.f32 %v602, %v621
      %v639 = vmul.f32 %v603, %v621
      %v640 = vmul.f32 %v604, %v621
      %v641 = vmul.f32 %v605, %v621
      %v642 = vmul.f32 %v606, %v621
      %v643 = vmul.f32 %v607, %v621
      %v644 = vmul.f32 %v608, %v621
      %v645 = vmul.f32 %v609, %v621
      %v646 = vmul.f32 %v610, %v621
      %v647 = vmul.f32 %v611, %v621
      %v648 = vmul.f32 %v612, %v621
      %v649 = vmul.f32 %v613, %v621
      %v650 = vmul.f32 %v614, %v621
      %v651 = vmul.f32 %v615, %v621
      %v652 = vmul.f32 %v616, %v621
      %v653 = vmul.f32 %v617, %v621
      %v654 = vmul.f32 %v618, %v621
      %v655 = vld [vmem:[%s353] sm:$0xff]
      %v656 = vld [vmem:[%s353 + $0x8] sm:$0xff]
      %v657 = vld [vmem:[%s353 + $0x10] sm:$0xff]
      %v658 = vld [vmem:[%s353 + $0x18] sm:$0xff]
      %v659 = vld [vmem:[%s353 + $0x20] sm:$0xff]
      %v660 = vld [vmem:[%s353 + $0x28] sm:$0xff]
      %v661 = vld [vmem:[%s353 + $0x30] sm:$0xff]
      %v662 = vld [vmem:[%s353 + $0x38] sm:$0xff]
      %v663 = vld [vmem:[%s353 + $0x40] sm:$0xff]
      %v664 = vld [vmem:[%s353 + $0x48] sm:$0xff]
      %v665 = vld [vmem:[%s353 + $0x50] sm:$0xff]
      %v666 = vld [vmem:[%s353 + $0x58] sm:$0xff]
      %v667 = vld [vmem:[%s353 + $0x60] sm:$0xff]
      %v668 = vld [vmem:[%s353 + $0x68] sm:$0xff]
      %v669 = vld [vmem:[%s353 + $0x70] sm:$0xff]
      %v670 = vld [vmem:[%s353 + $0x78] sm:$0xff]
      %v671 = vld [vmem:[%s353 + $0x80] sm:$0xff]
      %v672 = vld [vmem:[%s353 + $0x88] sm:$0xff]
      %v673 = vld [vmem:[%s353 + $0x90] sm:$0xff]
      %v674 = vld [vmem:[%s353 + $0x98] sm:$0xff]
      %v675 = vld [vmem:[%s353 + $0xa0] sm:$0xff]
      %v676 = vld [vmem:[%s353 + $0xa8] sm:$0xff]
      %v677 = vld [vmem:[%s353 + $0xb0] sm:$0xff]
      %v678 = vld [vmem:[%s353 + $0xb8] sm:$0xff]
      %v679 = vld [vmem:[%s353 + $0xc0] sm:$0xff]
      %v680 = vld [vmem:[%s353 + $0xc8] sm:$0xff]
      %v681 = vld [vmem:[%s353 + $0xd0] sm:$0xff]
      %v682 = vld [vmem:[%s353 + $0xd8] sm:$0xff]
      %v683 = vld [vmem:[%s353 + $0xe0] sm:$0xff]
      %v684 = vld [vmem:[%s353 + $0xe8] sm:$0xff]
      %v685 = vld [vmem:[%s353 + $0xf0] sm:$0xff]
      %v686 = vld [vmem:[%s353 + $0xf8] sm:$0xff]
      %v687 = vadd.f32 %v623, %v655
      %v688 = vadd.f32 %v624, %v656
      %v689 = vadd.f32 %v625, %v657
      %v690 = vadd.f32 %v626, %v658
      %v691 = vadd.f32 %v627, %v659
      %v692 = vadd.f32 %v628, %v660
      %v693 = vadd.f32 %v629, %v661
      %v694 = vadd.f32 %v630, %v662
      %v695 = vadd.f32 %v631, %v663
      %v696 = vadd.f32 %v632, %v664
      %v697 = vadd.f32 %v633, %v665
      %v698 = vadd.f32 %v634, %v666
      %v699 = vadd.f32 %v635, %v667
      %v700 = vadd.f32 %v636, %v668
      %v701 = vadd.f32 %v637, %v669
      %v702 = vadd.f32 %v638, %v670
      %v703 = vadd.f32 %v639, %v671
      %v704 = vadd.f32 %v640, %v672
      %v705 = vadd.f32 %v641, %v673
      %v706 = vadd.f32 %v642, %v674
      %v707 = vadd.f32 %v643, %v675
      %v708 = vadd.f32 %v644, %v676
      %v709 = vadd.f32 %v645, %v677
      %v710 = vadd.f32 %v646, %v678
      %v711 = vadd.f32 %v647, %v679
      %v712 = vadd.f32 %v648, %v680
      %v713 = vadd.f32 %v649, %v681
      %v714 = vadd.f32 %v650, %v682
      %v715 = vadd.f32 %v651, %v683
      %v716 = vadd.f32 %v652, %v684
      %v717 = vadd.f32 %v653, %v685
      %v718 = vadd.f32 %v654, %v686
      %v719 = vmax.f32 %v687, 0.0
      %v720 = vmax.f32 %v688, 0.0
      %v721 = vmax.f32 %v689, 0.0
      %v722 = vmax.f32 %v690, 0.0
      %v723 = vmax.f32 %v691, 0.0
      %v724 = vmax.f32 %v692, 0.0
      %v725 = vmax.f32 %v693, 0.0
      %v726 = vmax.f32 %v694, 0.0
      %v727 = vmax.f32 %v695, 0.0
      %v728 = vmax.f32 %v696, 0.0
      %v729 = vmax.f32 %v697, 0.0
      %v730 = vmax.f32 %v698, 0.0
      %v731 = vmax.f32 %v699, 0.0
      %v732 = vmax.f32 %v700, 0.0
      %v733 = vmax.f32 %v701, 0.0
      %v734 = vmax.f32 %v702, 0.0
      %v735 = vmax.f32 %v703, 0.0
      %v736 = vmax.f32 %v704, 0.0
      %v737 = vmax.f32 %v705, 0.0
      %v738 = vmax.f32 %v706, 0.0
      %v739 = vmax.f32 %v707, 0.0
      %v740 = vmax.f32 %v708, 0.0
      %v741 = vmax.f32 %v709, 0.0
      %v742 = vmax.f32 %v710, 0.0
      %v743 = vmax.f32 %v711, 0.0
      %v744 = vmax.f32 %v712, 0.0
      %v745 = vmax.f32 %v713, 0.0
      %v746 = vmax.f32 %v714, 0.0
      %v747 = vmax.f32 %v715, 0.0
      %v748 = vmax.f32 %v716, 0.0
      %v749 = vmax.f32 %v717, 0.0
      %v750 = vmax.f32 %v718, 0.0
      %751 = vst [vmem:[%s366] sm:$0xff] %v719
      %752 = vst [vmem:[%s366 + $0x8] sm:$0xff] %v720
      %753 = vst [vmem:[%s366 + $0x10] sm:$0xff] %v721
      %754 = vst [vmem:[%s366 + $0x18] sm:$0xff] %v722
      %755 = vst [vmem:[%s366 + $0x20] sm:$0xff] %v723
      %756 = vst [vmem:[%s366 + $0x28] sm:$0xff] %v724
      %757 = vst [vmem:[%s366 + $0x30] sm:$0xff] %v725
      %758 = vst [vmem:[%s366 + $0x38] sm:$0xff] %v726
      %759 = vst [vmem:[%s366 + $0x40] sm:$0xff] %v727
      %760 = vst [vmem:[%s366 + $0x48] sm:$0xff] %v728
      %761 = vst [vmem:[%s366 + $0x50] sm:$0xff] %v729
      %762 = vst [vmem:[%s366 + $0x58] sm:$0xff] %v730
      %763 = vst [vmem:[%s366 + $0x60] sm:$0xff] %v731
      %764 = vst [vmem:[%s366 + $0x68] sm:$0xff] %v732
      %765 = vst [vmem:[%s366 + $0x70] sm:$0xff] %v733
      %766 = vst [vmem:[%s366 + $0x78] sm:$0xff] %v734
      %767 = vst [vmem:[%s366 + $0x80] sm:$0xff] %v735
      %768 = vst [vmem:[%s366 + $0x88] sm:$0xff] %v736
      %769 = vst [vmem:[%s366 + $0x90] sm:$0xff] %v737
      %770 = vst [vmem:[%s366 + $0x98] sm:$0xff] %v738
      %771 = vst [vmem:[%s366 + $0xa0] sm:$0xff] %v739
      %772 = vst [vmem:[%s366 + $0xa8] sm:$0xff] %v740
      %773 = vst [vmem:[%s366 + $0xb0] sm:$0xff] %v741
      %774 = vst [vmem:[%s366 + $0xb8] sm:$0xff] %v742
      %775 = vst [vmem:[%s366 + $0xc0] sm:$0xff] %v743
      %776 = vst [vmem:[%s366 + $0xc8] sm:$0xff] %v744
      %777 = vst [vmem:[%s366 + $0xd0] sm:$0xff] %v745
      %778 = vst [vmem:[%s366 + $0xd8] sm:$0xff] %v746
      %779 = vst [vmem:[%s366 + $0xe0] sm:$0xff] %v747
      %780 = vst [vmem:[%s366 + $0xe8] sm:$0xff] %v748
      %781 = vst [vmem:[%s366 + $0xf0] sm:$0xff] %v749
      %782 = vst [vmem:[%s366 + $0xf8] sm:$0xff] %v750
      %s783 = smul.u32 32, %s23
      %p784 = scmp.lt.s32.totalorder %s22, 3
      %s785 = scalar_select %p784, %s22, 3
      %p786 = scmp.lt.s32.totalorder %s783, 31
      %s787 = scalar_select %p786, %s783, 31
      %s788 = smul.addr %s785, 32
      %s789 = sadd.s32 %s787, %s788
      %s790 = smul.addr %s789, 8
      %s791 = scalar_lea.vmem %s7, %s790
      // Predicated region
      $region53: #{se_basic_block.5} parent=47 // pred_check
        %p792 = pneg %p216
      $region54: #{se_basic_block.5} parent=47 // pred_check_branch
        %794 = sbr.rel (%p792) target = $region56
      $region55: #{se_basic_block.5} parent=47 // pred_region
        %s795 = smul.u32 32, %s23
      $region56: #{se_basic_block.5} parent=47 // pred_fallthru
        _
    $region48: #{se_basic_block.5} parent=5 // pred_fallthru
      _
    %p796 = scmp.le.s32.totalorder 2, %s13
    // Predicated region
    $region57: #{se_basic_block.5} parent=5 // pred_check
      %p797 = pneg %p796
    $region58: #{se_basic_block.5} parent=5 // pred_check_branch
      %799 = sbr.rel (%p797) target = $region60
    $region59: #{se_basic_block.5} parent=5 // pred_region
      %s800 = ssub.s32 %s13, 2
      // Predicated region
      $region61: #{se_basic_block.5} parent=59 // pred_check
        %p801 = pneg %p222
      $region62: #{se_basic_block.5} parent=59 // pred_check_branch
        %803 = sbr.rel (%p801) target = $region64
      $region63: #{se_basic_block.5} parent=59 // pred_region
        %s804 = smul.u32 32, %s25
        %p805 = scmp.lt.s32.totalorder %s24, 3
        %s806 = scalar_select %p805, %s24, 3
        %p807 = scmp.lt.s32.totalorder %s804, 31
        %s808 = scalar_select %p807, %s804, 31
        %s809 = smul.addr %s806, 32
        %s810 = sadd.s32 %s808, %s809
        %s811 = smul.addr %s810, 8
        %s812 = scalar_lea.vmem %s7, %s811
      $region64: #{se_basic_block.5} parent=59 // pred_fallthru
        _
    $region60: #{se_basic_block.5} parent=5 // pred_fallthru
      _
  $region6: #{se_basic_block.5} parent=0 // loop_footer
    %s17 = sadd.s32 1, %s13
  $region7: #{se_basic_block.5} parent=0 // loop_footer_branch
    %12 = sbr.rel target = $region3
  $region8: #{se_basic_block.5} parent=0 // loop_exit
    _

</llo_original>
